<compile_context>
chip_gen: v7x
topology: tpu7x:2x2x1
jax: 0.10.0
libtpu: 0.0.40
codegen_flags: <defaults>
</compile_context>

<pallas_src>
import functools

import jax
import jax.numpy as jnp
from jax import lax
from jax.experimental import pallas as pl
from jax.experimental.pallas import tpu as pltpu


def _round_up(x, m):
    return (x + m - 1) // m * m


def _choose_tm(M, tm_req):
    """Row-tile size: big tiles for DMA efficiency, low padding waste, and
    >= 2 row tiles so the parallel axis can shard across v7x's 2 TensorCores."""
    tm_req = max(8, min(int(tm_req), 1024))
    M8 = _round_up(M, 8)
    best, best_cost = 8, None
    for c in (1024, 768, 512, 384, 256, 192, 128, 96, 64, 32, 16, 8):
        if c > tm_req:
            continue
        mp = _round_up(M8, c)
        # Padded rows do full LN + 2x matmul work; each grid step costs ~0.35us
        # of pipeline overhead (~8 rows worth of work).
        cost = (mp - M8) + 8 * (mp // c)
        if best_cost is None or cost < best_cost:
            best, best_cost = c, cost
    if _round_up(M8, best) // best < 2 and M8 >= 16:
        best = _round_up((M8 + 1) // 2, 8)     # split into >=2 row tiles
    return best


def _ffn_kernel(x_ref, w1_ref, b1_ref, w2_ref, b2_ref, o_ref, h_ref, *,
                eps, dim, pad_cols, approximate_gelu):
    j = pl.program_id(1)

    # ---- Phase 1 (once per row tile): LayerNorm -> Linear1 -> GELU -> h ----
    @pl.when(j == 0)
    def _():
        x = x_ref[...].astype(jnp.float32)                     # (tm, dim_p)
        inv_dim = jnp.float32(1.0 / dim)
        mean = jnp.sum(x, axis=-1, keepdims=True) * inv_dim    # padded cols are 0
        xc = x - mean
        sq = jnp.sum(xc * xc, axis=-1, keepdims=True)
        if pad_cols:  # static: subtract the known contribution of padded cols
            sq = sq - jnp.float32(pad_cols) * mean * mean
        xn = xc * lax.rsqrt(sq * inv_dim + jnp.float32(eps))
        # LayerNorm affine (gamma/beta) is folded into W1/b1 in the wrapper;
        # padded rows of W1 are zero so padded xn columns contribute nothing.
        h = jnp.dot(xn.astype(jnp.bfloat16), w1_ref[...],
                    preferred_element_type=jnp.float32) + b1_ref[...]
        if approximate_gelu:
            h = jax.nn.gelu(h, approximate=True)               # tanh path -> EUP
        else:  # exact erf matches torch.nn.GELU() default
            h = 0.5 * h * (1.0 + lax.erf(h * jnp.float32(0.7071067811865476)))
        # Dropout: identity in eval mode.
        h_ref[...] = h.astype(jnp.bfloat16)

    # ---- Phase 2: Linear2 on one (out_p, tn) weight tile per grid step -----
    y = jnp.dot(h_ref[...], w2_ref[...],
                preferred_element_type=jnp.float32) + b2_ref[...]
    # Dropout: identity in eval mode.
    o_ref[...] = y.astype(o_ref.dtype)


def feed_forward(x, gamma, beta, w1, b1, w2, b2, *, eps=1e-5, tm=512,
                 approximate_gelu=False):
    """x: (B, S, dim) -> (B, S, out_dim). Linear weights stored (in, out)."""
    B, S, dim = x.shape
    out_dim = w1.shape[1]
    M = B * S
    itemsize = jnp.dtype(x.dtype).itemsize

    dim_p = _round_up(dim, 128)
    out_p = _round_up(out_dim, 128)

    # ---- generation-aware VMEM budget --------------------------------------
    vmem_cap = 64 << 20
    try:
        vmem_cap = int(pltpu.get_tpu_info().vmem_capacity_bytes) or vmem_cap
    except Exception:
        pass
    vmem_hi = int(vmem_cap * 0.875)          # headroom for compiler scratch

    def _fixed_bytes(t):
        return (2 * t * dim_p * itemsize          # x tiles (double-buffered)
                + t * out_p * 2                   # h scratch (bf16)
                + dim_p * out_p * 2               # W1 (bf16, single-buffered)
                + 4 * out_p * 4                   # biases
                + 3 * t * max(dim_p, out_p) * 4)  # f32 temporaries in phase 1

    tm = _choose_tm(M, tm)
    # Shrink the row tile if the fixed footprint (x tiles, W1, h, temps) plus a
    # minimal W2/output tile would not fit this generation's VMEM.
    while tm > 64 and (_fixed_bytes(tm) + 2 * out_p * 128 * 2
                       + 2 * tm * 128 * itemsize) > vmem_hi:
        tm = max(64, _round_up(tm // 2, 8))
    M_p = _round_up(M, tm)
    fixed = _fixed_bytes(tm)

    # ---- second-matmul N tile: resident W2 when it fits, else stream tiles --
    if fixed + out_p * out_p * 2 + 2 * tm * out_p * itemsize <= vmem_hi:
        tn = out_p
    else:
        per_col = 2 * out_p * 2 + 2 * tm * itemsize   # W2 + out dbl-buffers /col
        tn = (max(vmem_hi - fixed, 0) // per_col) // 128 * 128
        tn = int(min(out_p, max(128, tn)))
    n_j = -(-out_p // tn)
    out_pp = n_j * tn
    n_i = M_p // tm
    grid = (n_i, n_j)

    # ---- fold LayerNorm affine into the first linear (exact in f32) --------
    w1f = w1.astype(jnp.float32)
    w1_fold = gamma.astype(jnp.float32)[:, None] * w1f
    b1_fold = beta.astype(jnp.float32) @ w1f + b1.astype(jnp.float32)

    # ---- pad operands to lane-dense shapes (all padding is zeros) ----------
    x2 = x.reshape(M, dim)
    if M_p != M or dim_p != dim:
        x2 = jnp.pad(x2, ((0, M_p - M), (0, dim_p - dim)))
    w1p = jnp.pad(w1_fold, ((0, dim_p - dim),
                            (0, out_p - out_dim))).astype(jnp.bfloat16)
    b1p = jnp.pad(b1_fold, (0, out_p - out_dim)).reshape(1, out_p)
    w2p = jnp.pad(w2.astype(jnp.float32),
                  ((0, out_p - out_dim), (0, out_pp - out_dim))).astype(jnp.bfloat16)
    b2p = jnp.pad(b2.astype(jnp.float32), (0, out_pp - out_dim)).reshape(1, out_pp)

    # ---- VMEM limit + cost estimate -----------------------------------------
    used = (fixed
            + (1 if n_j == 1 else 2) * out_p * tn * 2   # W2 buffer(s)
            + 2 * tm * tn * itemsize)                   # output tiles
    vmem = int(min(max(used + (4 << 20), 16 << 20), vmem_hi))

    flops = (2 * M_p * dim_p * out_p          # first matmul
             + 2 * M_p * out_p * out_pp       # second matmul
             + 10 * M_p * dim_p)              # LayerNorm / elementwise
    w2_bytes = out_p * out_pp * 2 * (n_i if n_j > 1 else 1)
    bytes_accessed = (M_p * dim_p * itemsize + M_p * out_pp * itemsize
                      + dim_p * out_p * 2 + w2_bytes + (out_p + out_pp) * 4)
    cost = pl.CostEstimate(flops=int(flops), transcendentals=int(M_p * out_p),
                           bytes_accessed=int(bytes_accessed))

    kernel = functools.partial(_ffn_kernel, eps=eps, dim=dim,
                               pad_cols=dim_p - dim,
                               approximate_gelu=approximate_gelu)

    def _run(single_buffer):
        def const_spec(shape, imap):
            if single_buffer:
                return pl.BlockSpec(shape, imap, pipeline_mode=pl.Buffered(1))
            return pl.BlockSpec(shape, imap)

        w2_spec = (const_spec((out_p, tn), lambda i, j: (0, j)) if n_j == 1
                   else pl.BlockSpec((out_p, tn), lambda i, j: (0, j)))
        b2_spec = (const_spec((1, tn), lambda i, j: (0, j)) if n_j == 1
                   else pl.BlockSpec((1, tn), lambda i, j: (0, j)))

        return pl.pallas_call(
            kernel,
            out_shape=jax.ShapeDtypeStruct((M_p, out_pp), x.dtype),
            grid_spec=pltpu.PrefetchScalarGridSpec(
                num_scalar_prefetch=0,
                grid=grid,
                in_specs=[
                    pl.BlockSpec((tm, dim_p), lambda i, j: (i, 0)),        # x rows
                    const_spec((dim_p, out_p), lambda i, j: (0, 0)),       # W1 (bf16)
                    const_spec((1, out_p), lambda i, j: (0, 0)),           # b1
                    w2_spec,                                               # W2 tile
                    b2_spec,                                               # b2 tile
                ],
                out_specs=pl.BlockSpec((tm, tn), lambda i, j: (i, j)),
                scratch_shapes=[pltpu.VMEM((tm, out_p), jnp.bfloat16)],    # h
            ),
            compiler_params=pltpu.CompilerParams(
                dimension_semantics=("parallel", "arbitrary"),
                vmem_limit_bytes=vmem),
            cost_estimate=cost,
        )(x2, w1p, b1p, w2p, b2p)

    try:
        out = _run(single_buffer=True)
        out = jax.block_until_ready(out)
    except Exception:
        # Fallback if this jax/Mosaic build rejects pipeline_mode / Buffered(1).
        out = _run(single_buffer=False)

    return out[:M, :out_dim].reshape(B, S, out_dim)


def _reference(x, gamma, beta, w1, b1, w2, b2, eps=1e-5):
    x = x.astype(jnp.float32)
    mean = jnp.mean(x, axis=-1, keepdims=True)
    var = jnp.mean((x - mean) ** 2, axis=-1, keepdims=True)
    xn = (x - mean) * lax.rsqrt(var + eps) * gamma + beta
    h = xn @ w1 + b1
    h = 0.5 * h * (1.0 + lax.erf(h / jnp.sqrt(2.0)))
    return h @ w2 + b2


if __name__ == "__main__":
    key = jax.random.PRNGKey(0)
    B, S, dim, out_dim = 2, 8, 32, 32

    ks = jax.random.split(key, 7)
    x = jax.random.normal(ks[0], (B, S, dim), dtype=jnp.float32)
    # LayerNorm params (PyTorch init: weight=1, bias=0) — perturbed slightly so
    # the affine path is exercised.
    gamma = jnp.ones((dim,), jnp.float32) + 0.01 * jax.random.normal(ks[1], (dim,))
    beta = 0.01 * jax.random.normal(ks[2], (dim,))
    # Linear params stored as (in, out): transpose of torch's (out, in) layout.
    w1 = jax.random.normal(ks[3], (dim, out_dim), jnp.float32) / jnp.sqrt(dim)
    b1 = 0.01 * jax.random.normal(ks[4], (out_dim,))
    w2 = jax.random.normal(ks[5], (out_dim, out_dim), jnp.float32) / jnp.sqrt(out_dim)
    b2 = 0.01 * jax.random.normal(ks[6], (out_dim,))

    y = feed_forward(x, gamma, beta, w1, b1, w2, b2)
    y = jax.block_until_ready(y)

    y_ref = _reference(x, gamma, beta, w1, b1, w2, b2)
    assert y.shape == (B, S, out_dim)
    # bf16 MXU operands (f32 accumulation) -> loosened tolerance vs f32 reference.
    assert jnp.allclose(y, y_ref, atol=5e-2, rtol=5e-2), "mismatch vs reference"

    print("KERNEL_OK")
</pallas_src>

<mosaic_0001>
module attributes {stable_mosaic.version = 11 : i64} {
  func.func @_ffn_kernel(%arg0: i32, %arg1: i32, %arg2: memref<8x128xf32, #tpu.memory_space<vmem>>, %arg3: memref<128x128xbf16, #tpu.memory_space<vmem>>, %arg4: memref<1x128xf32, #tpu.memory_space<vmem>>, %arg5: memref<128x128xbf16, #tpu.memory_space<vmem>>, %arg6: memref<1x128xf32, #tpu.memory_space<vmem>>, %arg7: memref<8x128xf32, #tpu.memory_space<vmem>>, %arg8: memref<8x128xbf16, #tpu.memory_space<vmem>>) attributes {dimension_semantics = [#tpu.dimension_semantics<parallel>, #tpu.dimension_semantics<arbitrary>], iteration_bounds = array<i64: 2, 1>, scalar_prefetch = 0 : i64, scratch_operands = 1 : i64, tpu.core_type = #tpu.core_type<tc>, window_params = [{transform_indices = @transform_0, window_bounds = array<i64: 8, 128>}, {pipeline_mode = #tpu.pipeline_mode<synchronous>, transform_indices = @transform_1, window_bounds = array<i64: 128, 128>}, {pipeline_mode = #tpu.pipeline_mode<synchronous>, transform_indices = @transform_2, window_bounds = array<i64: 1, 128>}, {pipeline_mode = #tpu.pipeline_mode<synchronous>, transform_indices = @transform_3, window_bounds = array<i64: 128, 128>}, {pipeline_mode = #tpu.pipeline_mode<synchronous>, transform_indices = @transform_4, window_bounds = array<i64: 1, 128>}, {transform_indices = @transform_5, window_bounds = array<i64: 8, 128>}]} {
    %c0_i32 = arith.constant 0 : i32
    %0 = arith.cmpi eq, %arg1, %c0_i32 : i32
    %1 = arith.extui %0 : i1 to i32
    %c0_i32_0 = arith.constant 0 : i32
    %2 = arith.cmpi ne, %1, %c0_i32_0 : i32
    scf.if %2 {
      %c0_8 = arith.constant 0 : index
      %c0_9 = arith.constant 0 : index
      %10 = vector.load %arg2[%c0_8, %c0_9] : memref<8x128xf32, #tpu.memory_space<vmem>>, vector<8x128xf32>
      %cst_10 = arith.constant dense<0.000000e+00> : vector<8xf32>
      %11 = vector.multi_reduction <add>, %10, %cst_10 [1] : vector<8x128xf32> to vector<8xf32>
      %12 = vector.shape_cast %11 : vector<8xf32> to vector<8x1xf32>
      %cst_11 = arith.constant 3.125000e-02 : f32
      %13 = vector.broadcast %cst_11 : f32 to vector<8x1xf32>
      %14 = arith.mulf %12, %13 : vector<8x1xf32>
      %15 = vector.broadcast %14 : vector<8x1xf32> to vector<8x128xf32>
      %16 = arith.subf %10, %15 : vector<8x128xf32>
      %17 = arith.mulf %16, %16 : vector<8x128xf32>
      %cst_12 = arith.constant dense<0.000000e+00> : vector<8xf32>
      %18 = vector.multi_reduction <add>, %17, %cst_12 [1] : vector<8x128xf32> to vector<8xf32>
      %19 = vector.shape_cast %18 : vector<8xf32> to vector<8x1xf32>
      %cst_13 = arith.constant 9.600000e+01 : f32
      %20 = vector.broadcast %cst_13 : f32 to vector<8x1xf32>
      %21 = arith.mulf %20, %14 : vector<8x1xf32>
      %22 = arith.mulf %21, %14 : vector<8x1xf32>
      %23 = arith.subf %19, %22 : vector<8x1xf32>
      %cst_14 = arith.constant 3.125000e-02 : f32
      %24 = vector.broadcast %cst_14 : f32 to vector<8x1xf32>
      %25 = arith.mulf %23, %24 : vector<8x1xf32>
      %cst_15 = arith.constant 9.99999974E-6 : f32
      %26 = vector.broadcast %cst_15 : f32 to vector<8x1xf32>
      %27 = arith.addf %25, %26 : vector<8x1xf32>
      %28 = math.rsqrt %27 : vector<8x1xf32>
      %29 = vector.broadcast %28 : vector<8x1xf32> to vector<8x128xf32>
      %30 = arith.mulf %16, %29 : vector<8x128xf32>
      %31 = arith.truncf %30 : vector<8x128xf32> to vector<8x128xbf16>
      %c0_16 = arith.constant 0 : index
      %c0_17 = arith.constant 0 : index
      %32 = vector.load %arg3[%c0_16, %c0_17] : memref<128x128xbf16, #tpu.memory_space<vmem>>, vector<128x128xbf16>
      %cst_18 = arith.constant dense<0.000000e+00> : vector<8x128xf32>
      %33 = tpu.matmul %31, %32, %cst_18 {dimension_numbers = #tpu.dot_dimension_numbers<[1], [0], [0], [1], [0, 0, 1, 1], [], []>} : vector<8x128xbf16>, vector<128x128xbf16>, vector<8x128xf32> -> vector<8x128xf32>
      %c0_19 = arith.constant 0 : index
      %c0_20 = arith.constant 0 : index
      %34 = vector.load %arg4[%c0_19, %c0_20] : memref<1x128xf32, #tpu.memory_space<vmem>>, vector<1x128xf32>
      %35 = vector.broadcast %34 : vector<1x128xf32> to vector<8x128xf32>
      %36 = arith.addf %33, %35 : vector<8x128xf32>
      %cst_21 = arith.constant 5.000000e-01 : f32
      %37 = vector.broadcast %cst_21 : f32 to vector<8x128xf32>
      %38 = arith.mulf %37, %36 : vector<8x128xf32>
      %cst_22 = arith.constant 0.707106769 : f32
      %39 = vector.broadcast %cst_22 : f32 to vector<8x128xf32>
      %40 = arith.mulf %36, %39 : vector<8x128xf32>
      %41 = math.erf %40 : vector<8x128xf32>
      %cst_23 = arith.constant 1.000000e+00 : f32
      %42 = vector.broadcast %cst_23 : f32 to vector<8x128xf32>
      %43 = arith.addf %42, %41 : vector<8x128xf32>
      %44 = arith.mulf %38, %43 : vector<8x128xf32>
      %45 = arith.truncf %44 : vector<8x128xf32> to vector<8x128xbf16>
      %c0_24 = arith.constant 0 : index
      %c0_25 = arith.constant 0 : index
      %46 = vector.load %arg8[%c0_24, %c0_25] : memref<8x128xbf16, #tpu.memory_space<vmem>>, vector<8x128xbf16>
      tpu.vector_store %arg8[%c0_24, %c0_25], %45 {strides = array<i32>} : memref<8x128xbf16, #tpu.memory_space<vmem>>, vector<8x128xbf16>,
    } else {
    }
    %c0 = arith.constant 0 : index
    %c0_1 = arith.constant 0 : index
    %3 = vector.load %arg8[%c0, %c0_1] : memref<8x128xbf16, #tpu.memory_space<vmem>>, vector<8x128xbf16>
    %c0_2 = arith.constant 0 : index
    %c0_3 = arith.constant 0 : index
    %4 = vector.load %arg5[%c0_2, %c0_3] : memref<128x128xbf16, #tpu.memory_space<vmem>>, vector<128x128xbf16>
    %cst = arith.constant dense<0.000000e+00> : vector<8x128xf32>
    %5 = tpu.matmul %3, %4, %cst {dimension_numbers = #tpu.dot_dimension_numbers<[1], [0], [0], [1], [0, 0, 1, 1], [], []>} : vector<8x128xbf16>, vector<128x128xbf16>, vector<8x128xf32> -> vector<8x128xf32>
    %c0_4 = arith.constant 0 : index
    %c0_5 = arith.constant 0 : index
    %6 = vector.load %arg6[%c0_4, %c0_5] : memref<1x128xf32, #tpu.memory_space<vmem>>, vector<1x128xf32>
    %7 = vector.broadcast %6 : vector<1x128xf32> to vector<8x128xf32>
    %8 = arith.addf %5, %7 : vector<8x128xf32>
    %c0_6 = arith.constant 0 : index
    %c0_7 = arith.constant 0 : index
    %9 = vector.load %arg7[%c0_6, %c0_7] : memref<8x128xf32, #tpu.memory_space<vmem>>, vector<8x128xf32>
    tpu.vector_store %arg7[%c0_6, %c0_7], %8 {strides = array<i32>} : memref<8x128xf32, #tpu.memory_space<vmem>>, vector<8x128xf32>,
    return
  }
  func.func @transform_0(%arg0: i32, %arg1: i32) -> (i32, i32) {
    %c0_i32 = arith.constant 0 : i32
    %c0_i32_0 = arith.constant 0 : i32
    return %arg0, %c0_i32 : i32, i32
  }
  func.func @transform_1(%arg0: i32, %arg1: i32) -> (i32, i32) {
    %c0_i32 = arith.constant 0 : i32
    %c0_i32_0 = arith.constant 0 : i32
    %c0_i32_1 = arith.constant 0 : i32
    return %c0_i32, %c0_i32_0 : i32, i32
  }
  func.func @transform_2(%arg0: i32, %arg1: i32) -> (i32, i32) {
    %c0_i32 = arith.constant 0 : i32
    %c0_i32_0 = arith.constant 0 : i32
    %c0_i32_1 = arith.constant 0 : i32
    return %c0_i32, %c0_i32_0 : i32, i32
  }
  func.func @transform_3(%arg0: i32, %arg1: i32) -> (i32, i32) {
    %c0_i32 = arith.constant 0 : i32
    %c0_i32_0 = arith.constant 0 : i32
    return %c0_i32, %arg1 : i32, i32
  }
  func.func @transform_4(%arg0: i32, %arg1: i32) -> (i32, i32) {
    %c0_i32 = arith.constant 0 : i32
    %c0_i32_0 = arith.constant 0 : i32
    return %c0_i32, %arg1 : i32, i32
  }
  func.func @transform_5(%arg0: i32, %arg1: i32) -> (i32, i32) {
    %c0_i32 = arith.constant 0 : i32
    return %arg0, %arg1 : i32, i32
  }
}

module attributes {stable_mosaic.version = 11 : i64} {
  func.func @_ffn_kernel(%arg0: i32, %arg1: i32, %arg2: memref<8x128xf32, #tpu.memory_space<vmem>>, %arg3: memref<128x128xbf16, #tpu.memory_space<vmem>>, %arg4: memref<1x128xf32, #tpu.memory_space<vmem>>, %arg5: memref<128x128xbf16, #tpu.memory_space<vmem>>, %arg6: memref<1x128xf32, #tpu.memory_space<vmem>>, %arg7: memref<8x128xf32, #tpu.memory_space<vmem>>, %arg8: memref<8x128xbf16, #tpu.memory_space<vmem>>) attributes {dimension_semantics = [#tpu.dimension_semantics<parallel>, #tpu.dimension_semantics<arbitrary>], iteration_bounds = array<i64: 2, 1>, scalar_prefetch = 0 : i64, scratch_operands = 1 : i64, tpu.core_type = #tpu.core_type<tc>, window_params = [{transform_indices = @transform_0, window_bounds = array<i64: 8, 128>}, {pipeline_mode = #tpu.pipeline_mode<synchronous>, transform_indices = @transform_1, window_bounds = array<i64: 128, 128>}, {pipeline_mode = #tpu.pipeline_mode<synchronous>, transform_indices = @transform_2, window_bounds = array<i64: 1, 128>}, {transform_indices = @transform_3, window_bounds = array<i64: 128, 128>}, {transform_indices = @transform_4, window_bounds = array<i64: 1, 128>}, {transform_indices = @transform_5, window_bounds = array<i64: 8, 128>}]} {
    %c0_i32 = arith.constant 0 : i32
    %0 = arith.cmpi eq, %arg1, %c0_i32 : i32
    %1 = arith.extui %0 : i1 to i32
    %c0_i32_0 = arith.constant 0 : i32
    %2 = arith.cmpi ne, %1, %c0_i32_0 : i32
    scf.if %2 {
      %c0_8 = arith.constant 0 : index
      %c0_9 = arith.constant 0 : index
      %10 = vector.load %arg2[%c0_8, %c0_9] : memref<8x128xf32, #tpu.memory_space<vmem>>, vector<8x128xf32>
      %cst_10 = arith.constant dense<0.000000e+00> : vector<8xf32>
      %11 = vector.multi_reduction <add>, %10, %cst_10 [1] : vector<8x128xf32> to vector<8xf32>
      %12 = vector.shape_cast %11 : vector<8xf32> to vector<8x1xf32>
      %cst_11 = arith.constant 3.125000e-02 : f32
      %13 = vector.broadcast %cst_11 : f32 to vector<8x1xf32>
      %14 = arith.mulf %12, %13 : vector<8x1xf32>
      %15 = vector.broadcast %14 : vector<8x1xf32> to vector<8x128xf32>
      %16 = arith.subf %10, %15 : vector<8x128xf32>
      %17 = arith.mulf %16, %16 : vector<8x128xf32>
      %cst_12 = arith.constant dense<0.000000e+00> : vector<8xf32>
      %18 = vector.multi_reduction <add>, %17, %cst_12 [1] : vector<8x128xf32> to vector<8xf32>
      %19 = vector.shape_cast %18 : vector<8xf32> to vector<8x1xf32>
      %cst_13 = arith.constant 9.600000e+01 : f32
      %20 = vector.broadcast %cst_13 : f32 to vector<8x1xf32>
      %21 = arith.mulf %20, %14 : vector<8x1xf32>
      %22 = arith.mulf %21, %14 : vector<8x1xf32>
      %23 = arith.subf %19, %22 : vector<8x1xf32>
      %cst_14 = arith.constant 3.125000e-02 : f32
      %24 = vector.broadcast %cst_14 : f32 to vector<8x1xf32>
      %25 = arith.mulf %23, %24 : vector<8x1xf32>
      %cst_15 = arith.constant 9.99999974E-6 : f32
      %26 = vector.broadcast %cst_15 : f32 to vector<8x1xf32>
      %27 = arith.addf %25, %26 : vector<8x1xf32>
      %28 = math.rsqrt %27 : vector<8x1xf32>
      %29 = vector.broadcast %28 : vector<8x1xf32> to vector<8x128xf32>
      %30 = arith.mulf %16, %29 : vector<8x128xf32>
      %31 = arith.truncf %30 : vector<8x128xf32> to vector<8x128xbf16>
      %c0_16 = arith.constant 0 : index
      %c0_17 = arith.constant 0 : index
      %32 = vector.load %arg3[%c0_16, %c0_17] : memref<128x128xbf16, #tpu.memory_space<vmem>>, vector<128x128xbf16>
      %cst_18 = arith.constant dense<0.000000e+00> : vector<8x128xf32>
      %33 = tpu.matmul %31, %32, %cst_18 {dimension_numbers = #tpu.dot_dimension_numbers<[1], [0], [0], [1], [0, 0, 1, 1], [], []>} : vector<8x128xbf16>, vector<128x128xbf16>, vector<8x128xf32> -> vector<8x128xf32>
      %c0_19 = arith.constant 0 : index
      %c0_20 = arith.constant 0 : index
      %34 = vector.load %arg4[%c0_19, %c0_20] : memref<1x128xf32, #tpu.memory_space<vmem>>, vector<1x128xf32>
      %35 = vector.broadcast %34 : vector<1x128xf32> to vector<8x128xf32>
      %36 = arith.addf %33, %35 : vector<8x128xf32>
      %cst_21 = arith.constant 5.000000e-01 : f32
      %37 = vector.broadcast %cst_21 : f32 to vector<8x128xf32>
      %38 = arith.mulf %37, %36 : vector<8x128xf32>
      %cst_22 = arith.constant 0.707106769 : f32
      %39 = vector.broadcast %cst_22 : f32 to vector<8x128xf32>
      %40 = arith.mulf %36, %39 : vector<8x128xf32>
      %41 = math.erf %40 : vector<8x128xf32>
      %cst_23 = arith.constant 1.000000e+00 : f32
      %42 = vector.broadcast %cst_23 : f32 to vector<8x128xf32>
      %43 = arith.addf %42, %41 : vector<8x128xf32>
      %44 = arith.mulf %38, %43 : vector<8x128xf32>
      %45 = arith.truncf %44 : vector<8x128xf32> to vector<8x128xbf16>
      %c0_24 = arith.constant 0 : index
      %c0_25 = arith.constant 0 : index
      %46 = vector.load %arg8[%c0_24, %c0_25] : memref<8x128xbf16, #tpu.memory_space<vmem>>, vector<8x128xbf16>
      tpu.vector_store %arg8[%c0_24, %c0_25], %45 {strides = array<i32>} : memref<8x128xbf16, #tpu.memory_space<vmem>>, vector<8x128xbf16>,
    } else {
    }
    %c0 = arith.constant 0 : index
    %c0_1 = arith.constant 0 : index
    %3 = vector.load %arg8[%c0, %c0_1] : memref<8x128xbf16, #tpu.memory_space<vmem>>, vector<8x128xbf16>
    %c0_2 = arith.constant 0 : index
    %c0_3 = arith.constant 0 : index
    %4 = vector.load %arg5[%c0_2, %c0_3] : memref<128x128xbf16, #tpu.memory_space<vmem>>, vector<128x128xbf16>
    %cst = arith.constant dense<0.000000e+00> : vector<8x128xf32>
    %5 = tpu.matmul %3, %4, %cst {dimension_numbers = #tpu.dot_dimension_numbers<[1], [0], [0], [1], [0, 0, 1, 1], [], []>} : vector<8x128xbf16>, vector<128x128xbf16>, vector<8x128xf32> -> vector<8x128xf32>
    %c0_4 = arith.constant 0 : index
    %c0_5 = arith.constant 0 : index
    %6 = vector.load %arg6[%c0_4, %c0_5] : memref<1x128xf32, #tpu.memory_space<vmem>>, vector<1x128xf32>
    %7 = vector.broadcast %6 : vector<1x128xf32> to vector<8x128xf32>
    %8 = arith.addf %5, %7 : vector<8x128xf32>
    %c0_6 = arith.constant 0 : index
    %c0_7 = arith.constant 0 : index
    %9 = vector.load %arg7[%c0_6, %c0_7] : memref<8x128xf32, #tpu.memory_space<vmem>>, vector<8x128xf32>
    tpu.vector_store %arg7[%c0_6, %c0_7], %8 {strides = array<i32>} : memref<8x128xf32, #tpu.memory_space<vmem>>, vector<8x128xf32>,
    return
  }
  func.func @transform_0(%arg0: i32, %arg1: i32) -> (i32, i32) {
    %c0_i32 = arith.constant 0 : i32
    %c0_i32_0 = arith.constant 0 : i32
    return %arg0, %c0_i32 : i32, i32
  }
  func.func @transform_1(%arg0: i32, %arg1: i32) -> (i32, i32) {
    %c0_i32 = arith.constant 0 : i32
    %c0_i32_0 = arith.constant 0 : i32
    %c0_i32_1 = arith.constant 0 : i32
    return %c0_i32, %c0_i32_0 : i32, i32
  }
  func.func @transform_2(%arg0: i32, %arg1: i32) -> (i32, i32) {
    %c0_i32 = arith.constant 0 : i32
    %c0_i32_0 = arith.constant 0 : i32
    %c0_i32_1 = arith.constant 0 : i32
    return %c0_i32, %c0_i32_0 : i32, i32
  }
  func.func @transform_3(%arg0: i32, %arg1: i32) -> (i32, i32) {
    %c0_i32 = arith.constant 0 : i32
    %c0_i32_0 = arith.constant 0 : i32
    return %c0_i32, %arg1 : i32, i32
  }
  func.func @transform_4(%arg0: i32, %arg1: i32) -> (i32, i32) {
    %c0_i32 = arith.constant 0 : i32
    %c0_i32_0 = arith.constant 0 : i32
    return %c0_i32, %arg1 : i32, i32
  }
  func.func @transform_5(%arg0: i32, %arg1: i32) -> (i32, i32) {
    %c0_i32 = arith.constant 0 : i32
    return %arg0, %arg1 : i32, i32
  }
}

</mosaic_0001>

<llo_original>
// kernel: tpu_custom_call.1
$region0: #{tpu_custom_call.1}
  #allocation0 [shape = 'u32[]', space=smem, size = 0x4, offset = 0x4, fixed_abs, tag = 'smem constant byte address 0x4 - core index']
  #allocation1 [shape = 'u32[144,128]{1,0:T(1,128)}', space=vmem, size = 0x12000, scoped, tag = 'internal scratch']
  #allocation2 [shape = 'bf16[8,128]{1,0:T(8,128)(2,1)}', space=vmem, size = 0x800, scoped, tag = 'scratch operand']
  %s0 = inlined_call_operand.hbm [shape: f32[16,128], index: 0, kind: input, shape index: {}]
  %s1 = inlined_call_operand.hbm [shape: bf16[128,128], index: 1, kind: input, shape index: {}]
  %s2 = inlined_call_operand.vmem [shape: f32[1,128], index: 2, kind: input, shape index: {}]
  %s3 = inlined_call_operand.hbm [shape: bf16[128,128], index: 3, kind: input, shape index: {}]
  %s4 = inlined_call_operand.vmem [shape: f32[1,128], index: 4, kind: input, shape index: {}]
  %s5 = inlined_call_operand.hbm [shape: f32[16,128], index: 5, kind: output, shape index: {}]
  %s6 = sld [smem:[#allocation0]]
  $region69: #{tpu_custom_call.1} parent=0
    _
  %s8 = ssub.s32 1, %s6
  %s9 = scalar_select 0, %s8, %s6
  $region1: #{tpu_custom_call.1} parent=0
    #allocation3 [shape = 'u8[8192]{0}', space=vmem, size = 0x2000, scoped, tag = 'input window, operand 0']
    #allocation4 [shape = 's32[2]{0}', space=sflag, size = 0x8, scoped, tag = 'scoped memory for tpu_custom_call.1']
    #allocation5 [shape = 's32[2]{0}', space=sflag, size = 0x8, scoped, tag = 'scoped memory for tpu_custom_call.1']
    #allocation6 [shape = 'u8[32768]{0}', space=vmem, size = 0x8000, scoped, tag = 'input window, operand 1, single buffered']
    #allocation7 [shape = 's32[1]{0}', space=sflag, size = 0x4, scoped, tag = 'scoped memory for tpu_custom_call.1']
    #allocation8 [shape = 'u8[32768]{0}', space=vmem, size = 0x8000, scoped, tag = 'input window, operand 3, single buffered']
    #allocation9 [shape = 'u8[8192]{0}', space=vmem, size = 0x2000, scoped, tag = 'output window, operand 0']
    %10 = vsyncpa [#allocation4], 0
    %s11 = scalar_lea.sflag [#allocation4], 1
    %12 = vsyncpa %s11, 0
    %13 = vsyncpa [#allocation7], 0
    %14 = vsyncpa [#allocation5], 0
    %s15 = scalar_lea.sflag [#allocation5], 1
    %16 = vsyncpa %s15, 0
    loop: start=0, step=1, limit=4
    $region2: #{tpu_custom_call.1} parent=1 // loop_pre_header
      _
    $region3: #{tpu_custom_call.1} parent=1 // loop_header
      %s18 = sphi 0, %s22
      %p19 = scmp.ge.s32.totalorder %s18, 4
      %s25 = sphi 0, %s37
      %s26 = sphi 0, %s33
      %s27 = sphi 0, %s25
      %s28 = sphi 0, %s26
      %s29 = sphi 0, %s27
      %s30 = sphi 0, %s28
      %s40 = sphi 0, %s42
      %s43 = sphi 0, %s40
      %s44 = sphi 0, %s43
      %s60 = sphi 0, %s44
      %s64 = sphi 0, %s64
      %s66 = sphi 0, %s64
      %s67 = sphi 0, %s66
      %s81 = sphi 0, %s67
      %s85 = sphi 0, %s85
      %s87 = sphi 0, %s85
      %s88 = sphi 0, %s87
      %s102 = sphi 0, %s88
      %s108 = sphi 0, %s110
      %s111 = sphi 0, %s108
      %s112 = sphi 0, %s111
      %s128 = sphi 0, %s112
      %s134 = sphi 0, %s136
      %s137 = sphi 0, %s134
      %s138 = sphi 0, %s137
      %s154 = sphi 0, %s138
      %s162 = sphi 0, %s164
      %s165 = sphi 0, %s162
      %s166 = sphi 0, %s165
      %s182 = sphi 0, %s166
    $region4: #{tpu_custom_call.1} parent=1 // loop_header_branch
      %21 = sbr.rel (%p19) target = $region8
    $region5: #{tpu_custom_call.1} parent=1 // loop_body
      %s23 = ssub.s32 %s18, 1
      %s24 = ssub.s32 %s18, 2
      %s31 = sadd.s32 1, %s26
      %p32 = scmp.ge.s32.totalorder %s31, 1
      %s33 = scalar_select %p32, 0, %s31
      %s34 = sadd.s32 1, %s25
      %s35 = scalar_select %p32, %s34, %s25
      %p36 = scmp.ge.s32.totalorder %s35, 2
      %s37 = scalar_select %p36, 0, %s35
      %s38 = ssub.s32 %s25, %s37
      %p39 = scmp.eq.s32.totalorder %s38, 0
      %s41 = sadd.s32 %s40, 1
      %s42 = scalar_select %p39, %s40, %s41
      %p45 = pneg %p39
      %p46 = scmp.eq.s32.totalorder %s18, 1
      %p47 = por %p45, %p46
      %p48 = scmp.ne.s32.totalorder %s40, %s43
      %p49 = scmp.eq.s32.totalorder %s18, 0
      %p50 = por %p48, %p49
      %p51 = scmp.ne.s32.totalorder %s40, %s43
      %p52 = scmp.eq.s32.totalorder %s23, 1
      %p53 = por %p51, %p52
      %p54 = scmp.ne.s32.totalorder %s43, %s44
      %p55 = scmp.eq.s32.totalorder %s23, 0
      %p56 = por %p54, %p55
      %p57 = scmp.ne.s32.totalorder %s43, %s44
      %p58 = scmp.eq.s32.totalorder %s24, 1
      %p59 = por %p57, %p58
      %p61 = scmp.ne.s32.totalorder %s44, %s60
      %p62 = scmp.eq.s32.totalorder %s24, 0
      %p63 = por %p61, %p62
      %s65 = sadd.s32 %s64, 1
      %p68 = scmp.eq.s32.totalorder %s18, 1
      %p69 = scmp.ne.s32.totalorder %s64, %s66
      %p70 = scmp.eq.s32.totalorder %s18, 0
      %p71 = por %p69, %p70
      %p72 = scmp.ne.s32.totalorder %s64, %s66
      %p73 = scmp.eq.s32.totalorder %s23, 1
      %p74 = por %p72, %p73
      %p75 = scmp.ne.s32.totalorder %s66, %s67
      %p76 = scmp.eq.s32.totalorder %s23, 0
      %p77 = por %p75, %p76
      %p78 = scmp.ne.s32.totalorder %s66, %s67
      %p79 = scmp.eq.s32.totalorder %s24, 1
      %p80 = por %p78, %p79
      %p82 = scmp.ne.s32.totalorder %s67, %s81
      %p83 = scmp.eq.s32.totalorder %s24, 0
      %p84 = por %p82, %p83
      %s86 = sadd.s32 %s85, 1
      %p89 = scmp.eq.s32.totalorder %s18, 1
      %p90 = scmp.ne.s32.totalorder %s85, %s87
      %p91 = scmp.eq.s32.totalorder %s18, 0
      %p92 = por %p90, %p91
      %p93 = scmp.ne.s32.totalorder %s85, %s87
      %p94 = scmp.eq.s32.totalorder %s23, 1
      %p95 = por %p93, %p94
      %p96 = scmp.ne.s32.totalorder %s87, %s88
      %p97 = scmp.eq.s32.totalorder %s23, 0
      %p98 = por %p96, %p97
      %p99 = scmp.ne.s32.totalorder %s87, %s88
      %p100 = scmp.eq.s32.totalorder %s24, 1
      %p101 = por %p99, %p100
      %p103 = scmp.ne.s32.totalorder %s88, %s102
      %p104 = scmp.eq.s32.totalorder %s24, 0
      %p105 = por %p103, %p104
      %s106 = ssub.s32 %s26, %s33
      %p107 = scmp.eq.s32.totalorder %s106, 0
      %s109 = sadd.s32 %s108, 1
      %s110 = scalar_select %p107, %s108, %s109
      %p113 = pneg %p107
      %p114 = scmp.eq.s32.totalorder %s18, 1
      %p115 = por %p113, %p114
      %p116 = scmp.ne.s32.totalorder %s108, %s111
      %p117 = scmp.eq.s32.totalorder %s18, 0
      %p118 = por %p116, %p117
      %p119 = scmp.ne.s32.totalorder %s108, %s111
      %p120 = scmp.eq.s32.totalorder %s23, 1
      %p121 = por %p119, %p120
      %p122 = scmp.ne.s32.totalorder %s111, %s112
      %p123 = scmp.eq.s32.totalorder %s23, 0
      %p124 = por %p122, %p123
      %p125 = scmp.ne.s32.totalorder %s111, %s112
      %p126 = scmp.eq.s32.totalorder %s24, 1
      %p127 = por %p125, %p126
      %p129 = scmp.ne.s32.totalorder %s112, %s128
      %p130 = scmp.eq.s32.totalorder %s24, 0
      %p131 = por %p129, %p130
      %s132 = ssub.s32 %s26, %s33
      %p133 = scmp.eq.s32.totalorder %s132, 0
      %s135 = sadd.s32 %s134, 1
      %s136 = scalar_select %p133, %s134, %s135
      %p139 = pneg %p133
      %p140 = scmp.eq.s32.totalorder %s18, 1
      %p141 = por %p139, %p140
      %p142 = scmp.ne.s32.totalorder %s134, %s137
      %p143 = scmp.eq.s32.totalorder %s18, 0
      %p144 = por %p142, %p143
      %p145 = scmp.ne.s32.totalorder %s134, %s137
      %p146 = scmp.eq.s32.totalorder %s23, 1
      %p147 = por %p145, %p146
      %p148 = scmp.ne.s32.totalorder %s137, %s138
      %p149 = scmp.eq.s32.totalorder %s23, 0
      %p150 = por %p148, %p149
      %p151 = scmp.ne.s32.totalorder %s137, %s138
      %p152 = scmp.eq.s32.totalorder %s24, 1
      %p153 = por %p151, %p152
      %p155 = scmp.ne.s32.totalorder %s138, %s154
      %p156 = scmp.eq.s32.totalorder %s24, 0
      %p157 = por %p155, %p156
      %s158 = ssub.s32 %s25, %s37
      %s159 = ssub.s32 %s26, %s33
      %s160 = sor.u32 %s158, %s159
      %p161 = scmp.eq.s32.totalorder %s160, 0
      %s163 = sadd.s32 %s162, 1
      %s164 = scalar_select %p161, %s162, %s163
      %p167 = pneg %p161
      %p168 = scmp.eq.s32.totalorder %s18, 1
      %p169 = por %p167, %p168
      %p170 = scmp.ne.s32.totalorder %s162, %s165
      %p171 = scmp.eq.s32.totalorder %s18, 0
      %p172 = por %p170, %p171
      %p173 = scmp.ne.s32.totalorder %s162, %s165
      %p174 = scmp.eq.s32.totalorder %s23, 1
      %p175 = por %p173, %p174
      %p176 = scmp.ne.s32.totalorder %s165, %s166
      %p177 = scmp.eq.s32.totalorder %s23, 0
      %p178 = por %p176, %p177
      %p179 = scmp.ne.s32.totalorder %s165, %s166
      %p180 = scmp.eq.s32.totalorder %s24, 1
      %p181 = por %p179, %p180
      %p183 = scmp.ne.s32.totalorder %s166, %s182
      %p184 = scmp.eq.s32.totalorder %s24, 0
      %p185 = por %p183, %p184
      %p186 = scmp.le.s32.totalorder 1, %s18
      %p187 = scmp.lt.s32.totalorder %s18, 3
      %p188 = pnand %p186, %p187
      %p189 = pneg %p188
      // Predicated region
      $region9: #{tpu_custom_call.1} parent=5 // pred_check
        _
      $region10: #{tpu_custom_call.1} parent=5 // pred_check_branch
        %191 = sbr.rel (%p188) target = $region12
      $region11: #{tpu_custom_call.1} parent=5 // pred_region
        %s192 = ssub.s32 %s18, 1
        // Predicated region
        $region13: #{tpu_custom_call.1} parent=11 // pred_check
          %p193 = pneg %p77
        $region14: #{tpu_custom_call.1} parent=11 // pred_check_branch
          %195 = sbr.rel (%p193) target = $region16
        $region15: #{tpu_custom_call.1} parent=11 // pred_region
          %s197 = ssub.s32 1024, 1024
          %198 = vsyncadd [#allocation7], %s197
          %s199 = sshll.u32 [#allocation6], 4
          %s200 = int_to_ptr.vmem [resolvable:$true] %s199
          %205 = dma.hbm_to_vmem [thread:$0]  %s1, 1024, %s200, [#allocation7], 64, 64, 4
        $region16: #{tpu_custom_call.1} parent=11 // pred_fallthru
          _
        // Predicated region
        $region17: #{tpu_custom_call.1} parent=11 // pred_check
          %p206 = pneg %p98
        $region18: #{tpu_custom_call.1} parent=11 // pred_check_branch
          %208 = sbr.rel (%p206) target = $region20
        $region19: #{tpu_custom_call.1} parent=11 // pred_region
          _
        $region20: #{tpu_custom_call.1} parent=11 // pred_fallthru
          _
        // Predicated region
        $region21: #{tpu_custom_call.1} parent=11 // pred_check
          %p209 = pneg %p124
        $region22: #{tpu_custom_call.1} parent=11 // pred_check_branch
          %211 = sbr.rel (%p209) target = $region24
        $region23: #{tpu_custom_call.1} parent=11 // pred_region
          %s213 = ssub.s32 1024, 1024
          %214 = vsyncadd [#allocation7], %s213
          %s215 = smul.addr %s28, 64
          %s216 = scalar_lea.hbm %s3, %s215
          %s217 = sshll.u32 [#allocation8], 4
          %s218 = int_to_ptr.vmem [resolvable:$true] %s217
          %223 = dma.hbm_to_vmem [thread:$0]  %s216, 1024, %s218, [#allocation7], 64, 64, 4
        $region24: #{tpu_custom_call.1} parent=11 // pred_fallthru
          _
        // Predicated region
        $region25: #{tpu_custom_call.1} parent=11 // pred_check
          %p224 = pneg %p150
        $region26: #{tpu_custom_call.1} parent=11 // pred_check_branch
          %226 = sbr.rel (%p224) target = $region28
        $region27: #{tpu_custom_call.1} parent=11 // pred_region
          %p227 = scmp.lt.s32.totalorder %s28, 0
          %s228 = scalar_select %p227, %s28, 0
          %s229 = scalar_lea.vmem %s4, %s228
        $region28: #{tpu_custom_call.1} parent=11 // pred_fallthru
          _
      $region12: #{tpu_custom_call.1} parent=5 // pred_fallthru
        _
      %p230 = scmp.lt.s32.totalorder %s18, 2
      // Predicated region
      $region29: #{tpu_custom_call.1} parent=5 // pred_check
        %p231 = pneg %p230
      $region30: #{tpu_custom_call.1} parent=5 // pred_check_branch
        %233 = sbr.rel (%p231) target = $region32
      $region31: #{tpu_custom_call.1} parent=5 // pred_region
        // Predicated region
        $region33: #{tpu_custom_call.1} parent=31 // pred_check
          %p234 = pneg %p50
        $region34: #{tpu_custom_call.1} parent=31 // pred_check_branch
          %236 = sbr.rel (%p234) target = $region36
        $region35: #{tpu_custom_call.1} parent=31 // pred_region
          %s237 = sand.u32 %s40, 1
          %s238 = scalar_lea.sflag [#allocation4], %s237
          %s239 = sand.u32 %s40, 1
          %s240 = smul.addr %s239, 8
          %s241 = scalar_lea.vmem [#allocation3], %s240
          %s243 = ssub.s32 128, 128
          %244 = vsyncadd %s238, %s243
          %s245 = smul.addr %s25, 128
          %s246 = scalar_lea.hbm %s0, %s245
          %s248 = sshll.u32 %s241, 4
          %s249 = int_to_ptr.vmem [resolvable:$true] %s248
          %251 = dma.hbm_to_vmem [thread:$0]  %s246, 128, %s249, %s238
        $region36: #{tpu_custom_call.1} parent=31 // pred_fallthru
          _
      $region32: #{tpu_custom_call.1} parent=5 // pred_fallthru
        _
      %p252 = scmp.le.s32.totalorder 1, %s18
      %p253 = scmp.lt.s32.totalorder %s18, 3
      %p254 = pnand %p252, %p253
      %p255 = pneg %p254
      // Predicated region
      $region37: #{tpu_custom_call.1} parent=5 // pred_check
        _
      $region38: #{tpu_custom_call.1} parent=5 // pred_check_branch
        %257 = sbr.rel (%p254) target = $region40
      $region39: #{tpu_custom_call.1} parent=5 // pred_region
        %s258 = ssub.s32 %s18, 1
        %s259 = sand.u32 %s43, 1
        %s260 = scalar_lea.sflag [#allocation4], %s259
        %s261 = sand.u32 %s43, 1
        %s262 = smul.addr %s261, 8
        %s263 = scalar_lea.vmem [#allocation3], %s262
        // Predicated region
        $region41: #{tpu_custom_call.1} parent=39 // pred_check
          %p264 = pneg %p56
        $region42: #{tpu_custom_call.1} parent=39 // pred_check_branch
          %266 = sbr.rel (%p264) target = $region44
        $region43: #{tpu_custom_call.1} parent=39 // pred_region
          %267 = dma.done %s260, 128
        $region44: #{tpu_custom_call.1} parent=39 // pred_fallthru
          _
        // Predicated region
        $region45: #{tpu_custom_call.1} parent=39 // pred_check
          %p268 = pneg %p77
        $region46: #{tpu_custom_call.1} parent=39 // pred_check_branch
          %270 = sbr.rel (%p268) target = $region48
        $region47: #{tpu_custom_call.1} parent=39 // pred_region
          %271 = dma.done [#allocation7], 1024
        $region48: #{tpu_custom_call.1} parent=39 // pred_fallthru
          _
        // Predicated region
        $region49: #{tpu_custom_call.1} parent=39 // pred_check
          %p272 = pneg %p124
        $region50: #{tpu_custom_call.1} parent=39 // pred_check_branch
          %274 = sbr.rel (%p272) target = $region52
        $region51: #{tpu_custom_call.1} parent=39 // pred_region
          %275 = dma.done [#allocation7], 1024
        $region52: #{tpu_custom_call.1} parent=39 // pred_fallthru
          _
        %s276 = sand.u32 %s43, 1
        %s277 = scalar_lea.sflag [#allocation4], %s276
        %s278 = sand.u32 %s43, 1
        %s279 = smul.addr %s278, 8
        %s280 = scalar_lea.vmem [#allocation3], %s279
        %p281 = pneg %p56
        %p282 = pneg %p53
        %p283 = pneg %p77
        %p284 = pneg %p74
        %p285 = pneg %p98
        %p286 = pneg %p95
        %p287 = pneg %p124
        %p288 = pneg %p121
        %p289 = scmp.lt.s32.totalorder %s28, 0
        %s290 = scalar_select %p289, %s28, 0
        %s291 = scalar_lea.vmem %s4, %s290
        %p292 = pneg %p150
        %p293 = pneg %p147
        %p294 = pneg %p178
        %p295 = pneg %p175
        %s296 = sand.u32 %s165, 1
        %s297 = scalar_lea.sflag [#allocation5], %s296
        %s298 = sand.u32 %s165, 1
        %s299 = smul.addr %s298, 8
        %s300 = scalar_lea.vmem [#allocation9], %s299
        %p301 = scmp.lt.s32.totalorder %s28, 0
        %s302 = scalar_select %p301, %s28, 0
        %s303 = scalar_lea.vmem %s4, %s302
        %p305 = scmp.eq.s32.totalorder %s28, 0
        // Predicated region
        $region53: #{tpu_custom_call.1} parent=39 // pred_check
          %p306 = pneg %p305
        $region54: #{tpu_custom_call.1} parent=39 // pred_check_branch
          %308 = sbr.rel (%p306) target = $region56
        $region55: #{tpu_custom_call.1} parent=39 // pred_region
          %v309 = vld [vmem:[%s263] sm:$0xff]
          %310 = vadd.xlane.f32.xlu0 %v309
          %v311 = vpop.xlane.xlu0 %310
          %v312 = vmul.f32 %v311, 0.03125
          %v313 = vsub.f32 %v309, %v312
          %v314 = vmul.f32 %v313, %v313
          %315 = vadd.xlane.f32.xlu0 %v314
          %v316 = vpop.xlane.xlu0 %315
          %v317 = vmul.f32 %v312, 96.0
          %v318 = vmul.f32 %v317, %v312
          %v319 = vsub.f32 %v316, %v318
          %v320 = vmul.f32 %v319, 0.03125
          %v321 = vadd.f32 %v320, 1e-05
          %v322 = vrsqrt.pop %v321
          %v323 = vmul.f32 %v313, %v322
          %v324 = vpack.c.bf16 %v323, %v323
          %v325 = vld [vmem:[#allocation6] sm:$0xf]
          %v326 = vld [vmem:[#allocation6 + $0x4] sm:$0xf]
          %v327 = vld [vmem:[#allocation6 + $0x8] sm:$0xf]
          %v328 = vld [vmem:[#allocation6 + $0xc] sm:$0xf]
          %v329 = vld [vmem:[#allocation6 + $0x10] sm:$0xf]
          %v330 = vld [vmem:[#allocation6 + $0x14] sm:$0xf]
          %v331 = vld [vmem:[#allocation6 + $0x18] sm:$0xf]
          %v332 = vld [vmem:[#allocation6 + $0x1c] sm:$0xf]
          %v333 = vld [vmem:[#allocation6 + $0x20] sm:$0xf]
          %v334 = vld [vmem:[#allocation6 + $0x24] sm:$0xf]
          %v335 = vld [vmem:[#allocation6 + $0x28] sm:$0xf]
          %v336 = vld [vmem:[#allocation6 + $0x2c] sm:$0xf]
          %v337 = vld [vmem:[#allocation6 + $0x30] sm:$0xf]
          %v338 = vld [vmem:[#allocation6 + $0x34] sm:$0xf]
          %v339 = vld [vmem:[#allocation6 + $0x38] sm:$0xf]
          %v340 = vld [vmem:[#allocation6 + $0x3c] sm:$0xf]
          %v341 = vld [vmem:[%s2] sm:$0x1]
          %v343 = vlaneseq
          %v344 = vshrl.u32 %v343, 7
          %v345 = vsub.s32 0, %v344
          %v346 = vrot.slane %v341, %v345
          %v364 = vunpack.c.l.b16 %v325
          %v365 = vunpack.c.l.b16 %v326
          %v366 = vunpack.c.l.b16 %v327
          %v367 = vunpack.c.l.b16 %v328
          %v368 = vunpack.c.l.b16 %v329
          %v369 = vunpack.c.l.b16 %v330
          %v370 = vunpack.c.l.b16 %v331
          %v371 = vunpack.c.l.b16 %v332
          %v372 = vunpack.c.l.b16 %v333
          %v373 = vunpack.c.l.b16 %v334
          %v374 = vunpack.c.l.b16 %v335
          %v375 = vunpack.c.l.b16 %v336
          %v376 = vunpack.c.l.b16 %v337
          %v377 = vunpack.c.l.b16 %v338
          %v378 = vunpack.c.l.b16 %v339
          %v379 = vunpack.c.l.b16 %v340
          %v380 = vpack.c.b16 %v365, %v364
          %v381 = vpack.c.b16 %v367, %v366
          %v382 = vpack.c.b16 %v369, %v368
          %v383 = vpack.c.b16 %v371, %v370
          %v384 = vpack.c.b16 %v373, %v372
          %v385 = vpack.c.b16 %v375, %v374
          %v386 = vpack.c.b16 %v377, %v376
          %v387 = vpack.c.b16 %v379, %v378
          %396 = vmatprep.subr.bf16.mxu0 0
          %397 = vmatpush1.bf16.msra.mxu0 %v380
          %398 = vmatprep.subr.bf16.mxu0 0
          %399 = vmatpush1.bf16.msra.mxu0 %v381
          %400 = vmatprep.subr.bf16.mxu0 0
          %401 = vmatpush1.bf16.msra.mxu0 %v382
          %402 = vmatprep.subr.bf16.mxu0 0
          %403 = vmatpush1.bf16.msra.mxu0 %v383
          %404 = vmatprep.subr.bf16.mxu0 0
          %405 = vmatpush1.bf16.msra.mxu0 %v384
          %406 = vmatprep.subr.bf16.mxu0 0
          %407 = vmatpush1.bf16.msra.mxu0 %v385
          %408 = vmatprep.subr.bf16.mxu0 0
          %409 = vmatpush1.bf16.msra.mxu0 %v386
          %410 = vmatprep.subr.bf16.mxu0 0
          %411 = vmatpush1.bf16.msra.mxu0 %v387
          %412 = vmatprep.subr.bf16.mxu0 0
          %413 = vmatpush1.bf16.msra.mxu0 0
          %414 = vmatprep.subr.bf16.mxu0 0
          %415 = vmatpush1.bf16.msra.mxu0 0
          %416 = vmatprep.subr.bf16.mxu0 0
          %417 = vmatpush1.bf16.msra.mxu0 0
          %418 = vmatprep.subr.bf16.mxu0 0
          %419 = vmatpush1.bf16.msra.mxu0 0
          %420 = vmatprep.subr.bf16.mxu0 0
          %421 = vmatpush1.bf16.msra.mxu0 0
          %422 = vmatprep.subr.bf16.mxu0 0
          %423 = vmatpush1.bf16.msra.mxu0 0
          %424 = vmatprep.subr.bf16.mxu0 0
          %425 = vmatpush1.bf16.msra.mxu0 0
          %426 = vmatprep.subr.bf16.mxu0 0
          %427 = vmatpush1.bf16.msra.mxu0 0
          %428 = vmatprep.mubr.bf16.mxu0 0
          %429 = vmatmul.mubr.bf16.gmra.mrb[0].mxu0 %v324
          %v430 = vpop.f32.mrb[0].mxu0
          %v431 = vadd.f32 %v346, %v430
          %v432 = vpop.f32.mrb[0].mxu0
          %v433 = vpop.f32.mrb[0].mxu0
          %v434 = vpop.f32.mrb[0].mxu0
          %435 = vdwg.mxu0
          %v436 = vmul.f32 %v431, 0.5
          %v437 = vmul.f32 %v431, 0.70710677
          %v438 = verf.f32.pop %v437
          %v439 = vadd.f32 %v438, 1.0
          %v440 = vmul.f32 %v436, %v439
          %v441 = vpack.c.bf16 %v440, %v440
          %442 = vst [vmem:[#allocation2] sm:$0xf] %v441
        $region56: #{tpu_custom_call.1} parent=39 // pred_fallthru
          _
        %v443 = vld [vmem:[#allocation2] sm:$0xf]
        %v444 = vld [vmem:[#allocation8] sm:$0xf]
        %v445 = vld [vmem:[#allocation8 + $0x4] sm:$0xf]
        %v446 = vld [vmem:[#allocation8 + $0x8] sm:$0xf]
        %v447 = vld [vmem:[#allocation8 + $0xc] sm:$0xf]
        %v448 = vld [vmem:[#allocation8 + $0x10] sm:$0xf]
        %v449 = vld [vmem:[#allocation8 + $0x14] sm:$0xf]
        %v450 = vld [vmem:[#allocation8 + $0x18] sm:$0xf]
        %v451 = vld [vmem:[#allocation8 + $0x1c] sm:$0xf]
        %v452 = vld [vmem:[#allocation8 + $0x20] sm:$0xf]
        %v453 = vld [vmem:[#allocation8 + $0x24] sm:$0xf]
        %v454 = vld [vmem:[#allocation8 + $0x28] sm:$0xf]
        %v455 = vld [vmem:[#allocation8 + $0x2c] sm:$0xf]
        %v456 = vld [vmem:[#allocation8 + $0x30] sm:$0xf]
        %v457 = vld [vmem:[#allocation8 + $0x34] sm:$0xf]
        %v458 = vld [vmem:[#allocation8 + $0x38] sm:$0xf]
        %v459 = vld [vmem:[#allocation8 + $0x3c] sm:$0xf]
        %v460 = vld [vmem:[%s303] sm:$0x1]
        %v462 = vlaneseq
        %v463 = vshrl.u32 %v462, 7
        %v464 = vsub.s32 0, %v463
        %v465 = vrot.slane %v460, %v464
        %v483 = vunpack.c.l.b16 %v444
        %v484 = vunpack.c.l.b16 %v445
        %v485 = vunpack.c.l.b16 %v446
        %v486 = vunpack.c.l.b16 %v447
        %v487 = vunpack.c.l.b16 %v448
        %v488 = vunpack.c.l.b16 %v449
        %v489 = vunpack.c.l.b16 %v450
        %v490 = vunpack.c.l.b16 %v451
        %v491 = vunpack.c.l.b16 %v452
        %v492 = vunpack.c.l.b16 %v453
        %v493 = vunpack.c.l.b16 %v454
        %v494 = vunpack.c.l.b16 %v455
        %v495 = vunpack.c.l.b16 %v456
        %v496 = vunpack.c.l.b16 %v457
        %v497 = vunpack.c.l.b16 %v458
        %v498 = vunpack.c.l.b16 %v459
        %v499 = vpack.c.b16 %v484, %v483
        %v500 = vpack.c.b16 %v486, %v485
        %v501 = vpack.c.b16 %v488, %v487
        %v502 = vpack.c.b16 %v490, %v489
        %v503 = vpack.c.b16 %v492, %v491
        %v504 = vpack.c.b16 %v494, %v493
        %v505 = vpack.c.b16 %v496, %v495
        %v506 = vpack.c.b16 %v498, %v497
        %515 = vmatprep.subr.bf16.mxu0 0
        %516 = vmatpush1.bf16.msra.mxu0 %v499
        %517 = vmatprep.subr.bf16.mxu0 0
        %518 = vmatpush1.bf16.msra.mxu0 %v500
        %519 = vmatprep.subr.bf16.mxu0 0
        %520 = vmatpush1.bf16.msra.mxu0 %v501
        %521 = vmatprep.subr.bf16.mxu0 0
        %522 = vmatpush1.bf16.msra.mxu0 %v502
        %523 = vmatprep.subr.bf16.mxu0 0
        %524 = vmatpush1.bf16.msra.mxu0 %v503
        %525 = vmatprep.subr.bf16.mxu0 0
        %526 = vmatpush1.bf16.msra.mxu0 %v504
        %527 = vmatprep.subr.bf16.mxu0 0
        %528 = vmatpush1.bf16.msra.mxu0 %v505
        %529 = vmatprep.subr.bf16.mxu0 0
        %530 = vmatpush1.bf16.msra.mxu0 %v506
        %531 = vmatprep.subr.bf16.mxu0 0
        %532 = vmatpush1.bf16.msra.mxu0 0
        %533 = vmatprep.subr.bf16.mxu0 0
        %534 = vmatpush1.bf16.msra.mxu0 0
        %535 = vmatprep.subr.bf16.mxu0 0
        %536 = vmatpush1.bf16.msra.mxu0 0
        %537 = vmatprep.subr.bf16.mxu0 0
        %538 = vmatpush1.bf16.msra.mxu0 0
        %539 = vmatprep.subr.bf16.mxu0 0
        %540 = vmatpush1.bf16.msra.mxu0 0
        %541 = vmatprep.subr.bf16.mxu0 0
        %542 = vmatpush1.bf16.msra.mxu0 0
        %543 = vmatprep.subr.bf16.mxu0 0
        %544 = vmatpush1.bf16.msra.mxu0 0
        %545 = vmatprep.subr.bf16.mxu0 0
        %546 = vmatpush1.bf16.msra.mxu0 0
        %547 = vmatprep.mubr.bf16.mxu0 0
        %548 = vmatmul.mubr.bf16.gmra.mrb[0].mxu0 %v443
        %v549 = vpop.f32.mrb[0].mxu0
        %v550 = vadd.f32 %v465, %v549
        %v551 = vpop.f32.mrb[0].mxu0
        %v552 = vpop.f32.mrb[0].mxu0
        %v553 = vpop.f32.mrb[0].mxu0
        %554 = vdwg.mxu0
        %555 = vst [vmem:[%s300] sm:$0xff] %v550
        %s556 = sand.u32 %s165, 1
        %s557 = scalar_lea.sflag [#allocation5], %s556
        %s558 = sand.u32 %s165, 1
        %s559 = smul.addr %s558, 8
        %s560 = scalar_lea.vmem [#allocation9], %s559
        // Predicated region
        $region57: #{tpu_custom_call.1} parent=39 // pred_check
          %p561 = pneg %p175
        $region58: #{tpu_custom_call.1} parent=39 // pred_check_branch
          %563 = sbr.rel (%p561) target = $region60
        $region59: #{tpu_custom_call.1} parent=39 // pred_region
          %s565 = ssub.s32 128, 128
          %566 = vsyncadd %s557, %s565
          %s567 = sadd.s32 %s28, %s27
          %s568 = smul.addr %s567, 128
          %s569 = scalar_lea.hbm %s5, %s568
          %s571 = sshll.u32 %s560, 4
          %s572 = int_to_ptr.vmem [resolvable:$true] %s571
          %574 = dma.vmem_to_hbm [thread:$0]  %s572, 128, %s569, %s557
        $region60: #{tpu_custom_call.1} parent=39 // pred_fallthru
          _
      $region40: #{tpu_custom_call.1} parent=5 // pred_fallthru
        _
      %p575 = scmp.le.s32.totalorder 2, %s18
      // Predicated region
      $region61: #{tpu_custom_call.1} parent=5 // pred_check
        %p576 = pneg %p575
      $region62: #{tpu_custom_call.1} parent=5 // pred_check_branch
        %578 = sbr.rel (%p576) target = $region64
      $region63: #{tpu_custom_call.1} parent=5 // pred_region
        %s579 = ssub.s32 %s18, 2
        // Predicated region
        $region65: #{tpu_custom_call.1} parent=63 // pred_check
          %p580 = pneg %p181
        $region66: #{tpu_custom_call.1} parent=63 // pred_check_branch
          %582 = sbr.rel (%p580) target = $region68
        $region67: #{tpu_custom_call.1} parent=63 // pred_region
          %s583 = sand.u32 %s166, 1
          %s584 = scalar_lea.sflag [#allocation5], %s583
          %s585 = sand.u32 %s166, 1
          %s586 = smul.addr %s585, 8
          %s587 = scalar_lea.vmem [#allocation9], %s586
          %588 = dma.done %s584, 128
        $region68: #{tpu_custom_call.1} parent=63 // pred_fallthru
          _
      $region64: #{tpu_custom_call.1} parent=5 // pred_fallthru
        _
    $region6: #{tpu_custom_call.1} parent=1 // loop_footer
      %s22 = sadd.s32 1, %s18
    $region7: #{tpu_custom_call.1} parent=1 // loop_footer_branch
      %17 = sbr.rel target = $region3
    $region8: #{tpu_custom_call.1} parent=1 // loop_exit
      _
    %589 = vsyncpa [#allocation4], 1
    %s590 = scalar_lea.sflag [#allocation4], 1
    %591 = vsyncpa %s590, 1
    %592 = vsyncpa [#allocation7], 1
    %593 = vsyncpa [#allocation5], 1
    %s594 = scalar_lea.sflag [#allocation5], 1
    %595 = vsyncpa %s594, 1

// kernel: tpu_custom_call.1
$region0: #{tpu_custom_call.1}
  #allocation0 [shape = 'u32[]', space=smem, size = 0x4, offset = 0x4, fixed_abs, tag = 'smem constant byte address 0x4 - core index']
  #allocation1 [shape = 'u32[144,128]{1,0:T(1,128)}', space=vmem, size = 0x12000, scoped, tag = 'internal scratch']
  #allocation2 [shape = 'bf16[8,128]{1,0:T(8,128)(2,1)}', space=vmem, size = 0x800, scoped, tag = 'scratch operand']
  %s0 = inlined_call_operand.hbm [shape: f32[16,128], index: 0, kind: input, shape index: {}]
  %s1 = inlined_call_operand.hbm [shape: bf16[128,128], index: 1, kind: input, shape index: {}]
  %s2 = inlined_call_operand.vmem [shape: f32[1,128], index: 2, kind: input, shape index: {}]
  %s3 = inlined_call_operand.hbm [shape: bf16[128,128], index: 3, kind: input, shape index: {}]
  %s4 = inlined_call_operand.vmem [shape: f32[1,128], index: 4, kind: input, shape index: {}]
  %s5 = inlined_call_operand.hbm [shape: f32[16,128], index: 5, kind: output, shape index: {}]
  %s6 = sld [smem:[#allocation0]]
  $region69: #{tpu_custom_call.1} parent=0
    _
  %s8 = ssub.s32 1, %s6
  %s9 = scalar_select 0, %s8, %s6
  $region1: #{tpu_custom_call.1} parent=0
    #allocation3 [shape = 'u8[8192]{0}', space=vmem, size = 0x2000, scoped, tag = 'input window, operand 0']
    #allocation4 [shape = 's32[2]{0}', space=sflag, size = 0x8, scoped, tag = 'scoped memory for tpu_custom_call.1']
    #allocation5 [shape = 's32[2]{0}', space=sflag, size = 0x8, scoped, tag = 'scoped memory for tpu_custom_call.1']
    #allocation6 [shape = 'u8[32768]{0}', space=vmem, size = 0x8000, scoped, tag = 'input window, operand 1, single buffered']
    #allocation7 [shape = 's32[1]{0}', space=sflag, size = 0x4, scoped, tag = 'scoped memory for tpu_custom_call.1']
    #allocation8 [shape = 'u8[32768]{0}', space=vmem, size = 0x8000, scoped, tag = 'input window, operand 3, single buffered']
    #allocation9 [shape = 'u8[8192]{0}', space=vmem, size = 0x2000, scoped, tag = 'output window, operand 0']
    %10 = vsyncpa [#allocation4], 0
    %s11 = scalar_lea.sflag [#allocation4], 1
    %12 = vsyncpa %s11, 0
    %13 = vsyncpa [#allocation7], 0
    %14 = vsyncpa [#allocation5], 0
    %s15 = scalar_lea.sflag [#allocation5], 1
    %16 = vsyncpa %s15, 0
    loop: start=0, step=1, limit=4
    $region2: #{tpu_custom_call.1} parent=1 // loop_pre_header
      _
    $region3: #{tpu_custom_call.1} parent=1 // loop_header
      %s18 = sphi 0, %s22
      %p19 = scmp.ge.s32.totalorder %s18, 4
      %s25 = sphi 0, %s37
      %s26 = sphi 0, %s33
      %s27 = sphi 0, %s25
      %s28 = sphi 0, %s26
      %s29 = sphi 0, %s27
      %s30 = sphi 0, %s28
      %s40 = sphi 0, %s42
      %s43 = sphi 0, %s40
      %s44 = sphi 0, %s43
      %s60 = sphi 0, %s44
      %s64 = sphi 0, %s64
      %s66 = sphi 0, %s64
      %s67 = sphi 0, %s66
      %s81 = sphi 0, %s67
      %s85 = sphi 0, %s85
      %s87 = sphi 0, %s85
      %s88 = sphi 0, %s87
      %s102 = sphi 0, %s88
      %s108 = sphi 0, %s110
      %s111 = sphi 0, %s108
      %s112 = sphi 0, %s111
      %s128 = sphi 0, %s112
      %s134 = sphi 0, %s136
      %s137 = sphi 0, %s134
      %s138 = sphi 0, %s137
      %s154 = sphi 0, %s138
      %s162 = sphi 0, %s164
      %s165 = sphi 0, %s162
      %s166 = sphi 0, %s165
      %s182 = sphi 0, %s166
    $region4: #{tpu_custom_call.1} parent=1 // loop_header_branch
      %21 = sbr.rel (%p19) target = $region8
    $region5: #{tpu_custom_call.1} parent=1 // loop_body
      %s23 = ssub.s32 %s18, 1
      %s24 = ssub.s32 %s18, 2
      %s31 = sadd.s32 1, %s26
      %p32 = scmp.ge.s32.totalorder %s31, 1
      %s33 = scalar_select %p32, 0, %s31
      %s34 = sadd.s32 1, %s25
      %s35 = scalar_select %p32, %s34, %s25
      %p36 = scmp.ge.s32.totalorder %s35, 2
      %s37 = scalar_select %p36, 0, %s35
      %s38 = ssub.s32 %s25, %s37
      %p39 = scmp.eq.s32.totalorder %s38, 0
      %s41 = sadd.s32 %s40, 1
      %s42 = scalar_select %p39, %s40, %s41
      %p45 = pneg %p39
      %p46 = scmp.eq.s32.totalorder %s18, 1
      %p47 = por %p45, %p46
      %p48 = scmp.ne.s32.totalorder %s40, %s43
      %p49 = scmp.eq.s32.totalorder %s18, 0
      %p50 = por %p48, %p49
      %p51 = scmp.ne.s32.totalorder %s40, %s43
      %p52 = scmp.eq.s32.totalorder %s23, 1
      %p53 = por %p51, %p52
      %p54 = scmp.ne.s32.totalorder %s43, %s44
      %p55 = scmp.eq.s32.totalorder %s23, 0
      %p56 = por %p54, %p55
      %p57 = scmp.ne.s32.totalorder %s43, %s44
      %p58 = scmp.eq.s32.totalorder %s24, 1
      %p59 = por %p57, %p58
      %p61 = scmp.ne.s32.totalorder %s44, %s60
      %p62 = scmp.eq.s32.totalorder %s24, 0
      %p63 = por %p61, %p62
      %s65 = sadd.s32 %s64, 1
      %p68 = scmp.eq.s32.totalorder %s18, 1
      %p69 = scmp.ne.s32.totalorder %s64, %s66
      %p70 = scmp.eq.s32.totalorder %s18, 0
      %p71 = por %p69, %p70
      %p72 = scmp.ne.s32.totalorder %s64, %s66
      %p73 = scmp.eq.s32.totalorder %s23, 1
      %p74 = por %p72, %p73
      %p75 = scmp.ne.s32.totalorder %s66, %s67
      %p76 = scmp.eq.s32.totalorder %s23, 0
      %p77 = por %p75, %p76
      %p78 = scmp.ne.s32.totalorder %s66, %s67
      %p79 = scmp.eq.s32.totalorder %s24, 1
      %p80 = por %p78, %p79
      %p82 = scmp.ne.s32.totalorder %s67, %s81
      %p83 = scmp.eq.s32.totalorder %s24, 0
      %p84 = por %p82, %p83
      %s86 = sadd.s32 %s85, 1
      %p89 = scmp.eq.s32.totalorder %s18, 1
      %p90 = scmp.ne.s32.totalorder %s85, %s87
      %p91 = scmp.eq.s32.totalorder %s18, 0
      %p92 = por %p90, %p91
      %p93 = scmp.ne.s32.totalorder %s85, %s87
      %p94 = scmp.eq.s32.totalorder %s23, 1
      %p95 = por %p93, %p94
      %p96 = scmp.ne.s32.totalorder %s87, %s88
      %p97 = scmp.eq.s32.totalorder %s23, 0
      %p98 = por %p96, %p97
      %p99 = scmp.ne.s32.totalorder %s87, %s88
      %p100 = scmp.eq.s32.totalorder %s24, 1
      %p101 = por %p99, %p100
      %p103 = scmp.ne.s32.totalorder %s88, %s102
      %p104 = scmp.eq.s32.totalorder %s24, 0
      %p105 = por %p103, %p104
      %s106 = ssub.s32 %s26, %s33
      %p107 = scmp.eq.s32.totalorder %s106, 0
      %s109 = sadd.s32 %s108, 1
      %s110 = scalar_select %p107, %s108, %s109
      %p113 = pneg %p107
      %p114 = scmp.eq.s32.totalorder %s18, 1
      %p115 = por %p113, %p114
      %p116 = scmp.ne.s32.totalorder %s108, %s111
      %p117 = scmp.eq.s32.totalorder %s18, 0
      %p118 = por %p116, %p117
      %p119 = scmp.ne.s32.totalorder %s108, %s111
      %p120 = scmp.eq.s32.totalorder %s23, 1
      %p121 = por %p119, %p120
      %p122 = scmp.ne.s32.totalorder %s111, %s112
      %p123 = scmp.eq.s32.totalorder %s23, 0
      %p124 = por %p122, %p123
      %p125 = scmp.ne.s32.totalorder %s111, %s112
      %p126 = scmp.eq.s32.totalorder %s24, 1
      %p127 = por %p125, %p126
      %p129 = scmp.ne.s32.totalorder %s112, %s128
      %p130 = scmp.eq.s32.totalorder %s24, 0
      %p131 = por %p129, %p130
      %s132 = ssub.s32 %s26, %s33
      %p133 = scmp.eq.s32.totalorder %s132, 0
      %s135 = sadd.s32 %s134, 1
      %s136 = scalar_select %p133, %s134, %s135
      %p139 = pneg %p133
      %p140 = scmp.eq.s32.totalorder %s18, 1
      %p141 = por %p139, %p140
      %p142 = scmp.ne.s32.totalorder %s134, %s137
      %p143 = scmp.eq.s32.totalorder %s18, 0
      %p144 = por %p142, %p143
      %p145 = scmp.ne.s32.totalorder %s134, %s137
      %p146 = scmp.eq.s32.totalorder %s23, 1
      %p147 = por %p145, %p146
      %p148 = scmp.ne.s32.totalorder %s137, %s138
      %p149 = scmp.eq.s32.totalorder %s23, 0
      %p150 = por %p148, %p149
      %p151 = scmp.ne.s32.totalorder %s137, %s138
      %p152 = scmp.eq.s32.totalorder %s24, 1
      %p153 = por %p151, %p152
      %p155 = scmp.ne.s32.totalorder %s138, %s154
      %p156 = scmp.eq.s32.totalorder %s24, 0
      %p157 = por %p155, %p156
      %s158 = ssub.s32 %s25, %s37
      %s159 = ssub.s32 %s26, %s33
      %s160 = sor.u32 %s158, %s159
      %p161 = scmp.eq.s32.totalorder %s160, 0
      %s163 = sadd.s32 %s162, 1
      %s164 = scalar_select %p161, %s162, %s163
      %p167 = pneg %p161
      %p168 = scmp.eq.s32.totalorder %s18, 1
      %p169 = por %p167, %p168
      %p170 = scmp.ne.s32.totalorder %s162, %s165
      %p171 = scmp.eq.s32.totalorder %s18, 0
      %p172 = por %p170, %p171
      %p173 = scmp.ne.s32.totalorder %s162, %s165
      %p174 = scmp.eq.s32.totalorder %s23, 1
      %p175 = por %p173, %p174
      %p176 = scmp.ne.s32.totalorder %s165, %s166
      %p177 = scmp.eq.s32.totalorder %s23, 0
      %p178 = por %p176, %p177
      %p179 = scmp.ne.s32.totalorder %s165, %s166
      %p180 = scmp.eq.s32.totalorder %s24, 1
      %p181 = por %p179, %p180
      %p183 = scmp.ne.s32.totalorder %s166, %s182
      %p184 = scmp.eq.s32.totalorder %s24, 0
      %p185 = por %p183, %p184
      %p186 = scmp.le.s32.totalorder 1, %s18
      %p187 = scmp.lt.s32.totalorder %s18, 3
      %p188 = pnand %p186, %p187
      %p189 = pneg %p188
      // Predicated region
      $region9: #{tpu_custom_call.1} parent=5 // pred_check
        _
      $region10: #{tpu_custom_call.1} parent=5 // pred_check_branch
        %191 = sbr.rel (%p188) target = $region12
      $region11: #{tpu_custom_call.1} parent=5 // pred_region
        %s192 = ssub.s32 %s18, 1
        // Predicated region
        $region13: #{tpu_custom_call.1} parent=11 // pred_check
          %p193 = pneg %p77
        $region14: #{tpu_custom_call.1} parent=11 // pred_check_branch
          %195 = sbr.rel (%p193) target = $region16
        $region15: #{tpu_custom_call.1} parent=11 // pred_region
          %s197 = ssub.s32 1024, 1024
          %198 = vsyncadd [#allocation7], %s197
          %s199 = sshll.u32 [#allocation6], 4
          %s200 = int_to_ptr.vmem [resolvable:$true] %s199
          %205 = dma.hbm_to_vmem [thread:$0]  %s1, 1024, %s200, [#allocation7], 64, 64, 4
        $region16: #{tpu_custom_call.1} parent=11 // pred_fallthru
          _
        // Predicated region
        $region17: #{tpu_custom_call.1} parent=11 // pred_check
          %p206 = pneg %p98
        $region18: #{tpu_custom_call.1} parent=11 // pred_check_branch
          %208 = sbr.rel (%p206) target = $region20
        $region19: #{tpu_custom_call.1} parent=11 // pred_region
          _
        $region20: #{tpu_custom_call.1} parent=11 // pred_fallthru
          _
        // Predicated region
        $region21: #{tpu_custom_call.1} parent=11 // pred_check
          %p209 = pneg %p124
        $region22: #{tpu_custom_call.1} parent=11 // pred_check_branch
          %211 = sbr.rel (%p209) target = $region24
        $region23: #{tpu_custom_call.1} parent=11 // pred_region
          %s213 = ssub.s32 1024, 1024
          %214 = vsyncadd [#allocation7], %s213
          %s215 = smul.addr %s28, 64
          %s216 = scalar_lea.hbm %s3, %s215
          %s217 = sshll.u32 [#allocation8], 4
          %s218 = int_to_ptr.vmem [resolvable:$true] %s217
          %223 = dma.hbm_to_vmem [thread:$0]  %s216, 1024, %s218, [#allocation7], 64, 64, 4
        $region24: #{tpu_custom_call.1} parent=11 // pred_fallthru
          _
        // Predicated region
        $region25: #{tpu_custom_call.1} parent=11 // pred_check
          %p224 = pneg %p150
        $region26: #{tpu_custom_call.1} parent=11 // pred_check_branch
          %226 = sbr.rel (%p224) target = $region28
        $region27: #{tpu_custom_call.1} parent=11 // pred_region
          %p227 = scmp.lt.s32.totalorder %s28, 0
          %s228 = scalar_select %p227, %s28, 0
          %s229 = scalar_lea.vmem %s4, %s228
        $region28: #{tpu_custom_call.1} parent=11 // pred_fallthru
          _
      $region12: #{tpu_custom_call.1} parent=5 // pred_fallthru
        _
      %p230 = scmp.lt.s32.totalorder %s18, 2
      // Predicated region
      $region29: #{tpu_custom_call.1} parent=5 // pred_check
        %p231 = pneg %p230
      $region30: #{tpu_custom_call.1} parent=5 // pred_check_branch
        %233 = sbr.rel (%p231) target = $region32
      $region31: #{tpu_custom_call.1} parent=5 // pred_region
        // Predicated region
        $region33: #{tpu_custom_call.1} parent=31 // pred_check
          %p234 = pneg %p50
        $region34: #{tpu_custom_call.1} parent=31 // pred_check_branch
          %236 = sbr.rel (%p234) target = $region36
        $region35: #{tpu_custom_call.1} parent=31 // pred_region
          %s237 = sand.u32 %s40, 1
          %s238 = scalar_lea.sflag [#allocation4], %s237
          %s239 = sand.u32 %s40, 1
          %s240 = smul.addr %s239, 8
          %s241 = scalar_lea.vmem [#allocation3], %s240
          %s243 = ssub.s32 128, 128
          %244 = vsyncadd %s238, %s243
          %s245 = smul.addr %s25, 128
          %s246 = scalar_lea.hbm %s0, %s245
          %s248 = sshll.u32 %s241, 4
          %s249 = int_to_ptr.vmem [resolvable:$true] %s248
          %251 = dma.hbm_to_vmem [thread:$0]  %s246, 128, %s249, %s238
        $region36: #{tpu_custom_call.1} parent=31 // pred_fallthru
          _
      $region32: #{tpu_custom_call.1} parent=5 // pred_fallthru
        _
      %p252 = scmp.le.s32.totalorder 1, %s18
      %p253 = scmp.lt.s32.totalorder %s18, 3
      %p254 = pnand %p252, %p253
      %p255 = pneg %p254
      // Predicated region
      $region37: #{tpu_custom_call.1} parent=5 // pred_check
        _
      $region38: #{tpu_custom_call.1} parent=5 // pred_check_branch
        %257 = sbr.rel (%p254) target = $region40
      $region39: #{tpu_custom_call.1} parent=5 // pred_region
        %s258 = ssub.s32 %s18, 1
        %s259 = sand.u32 %s43, 1
        %s260 = scalar_lea.sflag [#allocation4], %s259
        %s261 = sand.u32 %s43, 1
        %s262 = smul.addr %s261, 8
        %s263 = scalar_lea.vmem [#allocation3], %s262
        // Predicated region
        $region41: #{tpu_custom_call.1} parent=39 // pred_check
          %p264 = pneg %p56
        $region42: #{tpu_custom_call.1} parent=39 // pred_check_branch
          %266 = sbr.rel (%p264) target = $region44
        $region43: #{tpu_custom_call.1} parent=39 // pred_region
          %267 = dma.done %s260, 128
        $region44: #{tpu_custom_call.1} parent=39 // pred_fallthru
          _
        // Predicated region
        $region45: #{tpu_custom_call.1} parent=39 // pred_check
          %p268 = pneg %p77
        $region46: #{tpu_custom_call.1} parent=39 // pred_check_branch
          %270 = sbr.rel (%p268) target = $region48
        $region47: #{tpu_custom_call.1} parent=39 // pred_region
          %271 = dma.done [#allocation7], 1024
        $region48: #{tpu_custom_call.1} parent=39 // pred_fallthru
          _
        // Predicated region
        $region49: #{tpu_custom_call.1} parent=39 // pred_check
          %p272 = pneg %p124
        $region50: #{tpu_custom_call.1} parent=39 // pred_check_branch
          %274 = sbr.rel (%p272) target = $region52
        $region51: #{tpu_custom_call.1} parent=39 // pred_region
          %275 = dma.done [#allocation7], 1024
        $region52: #{tpu_custom_call.1} parent=39 // pred_fallthru
          _
        %s276 = sand.u32 %s43, 1
        %s277 = scalar_lea.sflag [#allocation4], %s276
        %s278 = sand.u32 %s43, 1
        %s279 = smul.addr %s278, 8
        %s280 = scalar_lea.vmem [#allocation3], %s279
        %p281 = pneg %p56
        %p282 = pneg %p53
        %p283 = pneg %p77
        %p284 = pneg %p74
        %p285 = pneg %p98
        %p286 = pneg %p95
        %p287 = pneg %p124
        %p288 = pneg %p121
        %p289 = scmp.lt.s32.totalorder %s28, 0
        %s290 = scalar_select %p289, %s28, 0
        %s291 = scalar_lea.vmem %s4, %s290
        %p292 = pneg %p150
        %p293 = pneg %p147
        %p294 = pneg %p178
        %p295 = pneg %p175
        %s296 = sand.u32 %s165, 1
        %s297 = scalar_lea.sflag [#allocation5], %s296
        %s298 = sand.u32 %s165, 1
        %s299 = smul.addr %s298, 8
        %s300 = scalar_lea.vmem [#allocation9], %s299
        %p301 = scmp.lt.s32.totalorder %s28, 0
        %s302 = scalar_select %p301, %s28, 0
        %s303 = scalar_lea.vmem %s4, %s302
        %p305 = scmp.eq.s32.totalorder %s28, 0
        // Predicated region
        $region53: #{tpu_custom_call.1} parent=39 // pred_check
          %p306 = pneg %p305
        $region54: #{tpu_custom_call.1} parent=39 // pred_check_branch
          %308 = sbr.rel (%p306) target = $region56
        $region55: #{tpu_custom_call.1} parent=39 // pred_region
          %v309 = vld [vmem:[%s263] sm:$0xff]
          %310 = vadd.xlane.f32.xlu0 %v309
          %v311 = vpop.xlane.xlu0 %310
          %v312 = vmul.f32 %v311, 0.03125
          %v313 = vsub.f32 %v309, %v312
          %v314 = vmul.f32 %v313, %v313
          %315 = vadd.xlane.f32.xlu0 %v314
          %v316 = vpop.xlane.xlu0 %315
          %v317 = vmul.f32 %v312, 96.0
          %v318 = vmul.f32 %v317, %v312
          %v319 = vsub.f32 %v316, %v318
          %v320 = vmul.f32 %v319, 0.03125
          %v321 = vadd.f32 %v320, 1e-05
          %v322 = vrsqrt.pop %v321
          %v323 = vmul.f32 %v313, %v322
          %v324 = vpack.c.bf16 %v323, %v323
          %v325 = vld [vmem:[#allocation6] sm:$0xf]
          %v326 = vld [vmem:[#allocation6 + $0x4] sm:$0xf]
          %v327 = vld [vmem:[#allocation6 + $0x8] sm:$0xf]
          %v328 = vld [vmem:[#allocation6 + $0xc] sm:$0xf]
          %v329 = vld [vmem:[#allocation6 + $0x10] sm:$0xf]
          %v330 = vld [vmem:[#allocation6 + $0x14] sm:$0xf]
          %v331 = vld [vmem:[#allocation6 + $0x18] sm:$0xf]
          %v332 = vld [vmem:[#allocation6 + $0x1c] sm:$0xf]
          %v333 = vld [vmem:[#allocation6 + $0x20] sm:$0xf]
          %v334 = vld [vmem:[#allocation6 + $0x24] sm:$0xf]
          %v335 = vld [vmem:[#allocation6 + $0x28] sm:$0xf]
          %v336 = vld [vmem:[#allocation6 + $0x2c] sm:$0xf]
          %v337 = vld [vmem:[#allocation6 + $0x30] sm:$0xf]
          %v338 = vld [vmem:[#allocation6 + $0x34] sm:$0xf]
          %v339 = vld [vmem:[#allocation6 + $0x38] sm:$0xf]
          %v340 = vld [vmem:[#allocation6 + $0x3c] sm:$0xf]
          %v341 = vld [vmem:[%s2] sm:$0x1]
          %v343 = vlaneseq
          %v344 = vshrl.u32 %v343, 7
          %v345 = vsub.s32 0, %v344
          %v346 = vrot.slane %v341, %v345
          %v364 = vunpack.c.l.b16 %v325
          %v365 = vunpack.c.l.b16 %v326
          %v366 = vunpack.c.l.b16 %v327
          %v367 = vunpack.c.l.b16 %v328
          %v368 = vunpack.c.l.b16 %v329
          %v369 = vunpack.c.l.b16 %v330
          %v370 = vunpack.c.l.b16 %v331
          %v371 = vunpack.c.l.b16 %v332
          %v372 = vunpack.c.l.b16 %v333
          %v373 = vunpack.c.l.b16 %v334
          %v374 = vunpack.c.l.b16 %v335
          %v375 = vunpack.c.l.b16 %v336
          %v376 = vunpack.c.l.b16 %v337
          %v377 = vunpack.c.l.b16 %v338
          %v378 = vunpack.c.l.b16 %v339
          %v379 = vunpack.c.l.b16 %v340
          %v380 = vpack.c.b16 %v365, %v364
          %v381 = vpack.c.b16 %v367, %v366
          %v382 = vpack.c.b16 %v369, %v368
          %v383 = vpack.c.b16 %v371, %v370
          %v384 = vpack.c.b16 %v373, %v372
          %v385 = vpack.c.b16 %v375, %v374
          %v386 = vpack.c.b16 %v377, %v376
          %v387 = vpack.c.b16 %v379, %v378
          %396 = vmatprep.subr.bf16.mxu0 0
          %397 = vmatpush1.bf16.msra.mxu0 %v380
          %398 = vmatprep.subr.bf16.mxu0 0
          %399 = vmatpush1.bf16.msra.mxu0 %v381
          %400 = vmatprep.subr.bf16.mxu0 0
          %401 = vmatpush1.bf16.msra.mxu0 %v382
          %402 = vmatprep.subr.bf16.mxu0 0
          %403 = vmatpush1.bf16.msra.mxu0 %v383
          %404 = vmatprep.subr.bf16.mxu0 0
          %405 = vmatpush1.bf16.msra.mxu0 %v384
          %406 = vmatprep.subr.bf16.mxu0 0
          %407 = vmatpush1.bf16.msra.mxu0 %v385
          %408 = vmatprep.subr.bf16.mxu0 0
          %409 = vmatpush1.bf16.msra.mxu0 %v386
          %410 = vmatprep.subr.bf16.mxu0 0
          %411 = vmatpush1.bf16.msra.mxu0 %v387
          %412 = vmatprep.subr.bf16.mxu0 0
          %413 = vmatpush1.bf16.msra.mxu0 0
          %414 = vmatprep.subr.bf16.mxu0 0
          %415 = vmatpush1.bf16.msra.mxu0 0
          %416 = vmatprep.subr.bf16.mxu0 0
          %417 = vmatpush1.bf16.msra.mxu0 0
          %418 = vmatprep.subr.bf16.mxu0 0
          %419 = vmatpush1.bf16.msra.mxu0 0
          %420 = vmatprep.subr.bf16.mxu0 0
          %421 = vmatpush1.bf16.msra.mxu0 0
          %422 = vmatprep.subr.bf16.mxu0 0
          %423 = vmatpush1.bf16.msra.mxu0 0
          %424 = vmatprep.subr.bf16.mxu0 0
          %425 = vmatpush1.bf16.msra.mxu0 0
          %426 = vmatprep.subr.bf16.mxu0 0
          %427 = vmatpush1.bf16.msra.mxu0 0
          %428 = vmatprep.mubr.bf16.mxu0 0
          %429 = vmatmul.mubr.bf16.gmra.mrb[0].mxu0 %v324
          %v430 = vpop.f32.mrb[0].mxu0
          %v431 = vadd.f32 %v346, %v430
          %v432 = vpop.f32.mrb[0].mxu0
          %v433 = vpop.f32.mrb[0].mxu0
          %v434 = vpop.f32.mrb[0].mxu0
          %435 = vdwg.mxu0
          %v436 = vmul.f32 %v431, 0.5
          %v437 = vmul.f32 %v431, 0.70710677
          %v438 = verf.f32.pop %v437
          %v439 = vadd.f32 %v438, 1.0
          %v440 = vmul.f32 %v436, %v439
          %v441 = vpack.c.bf16 %v440, %v440
          %442 = vst [vmem:[#allocation2] sm:$0xf] %v441
        $region56: #{tpu_custom_call.1} parent=39 // pred_fallthru
          _
        %v443 = vld [vmem:[#allocation2] sm:$0xf]
        %v444 = vld [vmem:[#allocation8] sm:$0xf]
        %v445 = vld [vmem:[#allocation8 + $0x4] sm:$0xf]
        %v446 = vld [vmem:[#allocation8 + $0x8] sm:$0xf]
        %v447 = vld [vmem:[#allocation8 + $0xc] sm:$0xf]
        %v448 = vld [vmem:[#allocation8 + $0x10] sm:$0xf]
        %v449 = vld [vmem:[#allocation8 + $0x14] sm:$0xf]
        %v450 = vld [vmem:[#allocation8 + $0x18] sm:$0xf]
        %v451 = vld [vmem:[#allocation8 + $0x1c] sm:$0xf]
        %v452 = vld [vmem:[#allocation8 + $0x20] sm:$0xf]
        %v453 = vld [vmem:[#allocation8 + $0x24] sm:$0xf]
        %v454 = vld [vmem:[#allocation8 + $0x28] sm:$0xf]
        %v455 = vld [vmem:[#allocation8 + $0x2c] sm:$0xf]
        %v456 = vld [vmem:[#allocation8 + $0x30] sm:$0xf]
        %v457 = vld [vmem:[#allocation8 + $0x34] sm:$0xf]
        %v458 = vld [vmem:[#allocation8 + $0x38] sm:$0xf]
        %v459 = vld [vmem:[#allocation8 + $0x3c] sm:$0xf]
        %v460 = vld [vmem:[%s303] sm:$0x1]
        %v462 = vlaneseq
        %v463 = vshrl.u32 %v462, 7
        %v464 = vsub.s32 0, %v463
        %v465 = vrot.slane %v460, %v464
        %v483 = vunpack.c.l.b16 %v444
        %v484 = vunpack.c.l.b16 %v445
        %v485 = vunpack.c.l.b16 %v446
        %v486 = vunpack.c.l.b16 %v447
        %v487 = vunpack.c.l.b16 %v448
        %v488 = vunpack.c.l.b16 %v449
        %v489 = vunpack.c.l.b16 %v450
        %v490 = vunpack.c.l.b16 %v451
        %v491 = vunpack.c.l.b16 %v452
        %v492 = vunpack.c.l.b16 %v453
        %v493 = vunpack.c.l.b16 %v454
        %v494 = vunpack.c.l.b16 %v455
        %v495 = vunpack.c.l.b16 %v456
        %v496 = vunpack.c.l.b16 %v457
        %v497 = vunpack.c.l.b16 %v458
        %v498 = vunpack.c.l.b16 %v459
        %v499 = vpack.c.b16 %v484, %v483
        %v500 = vpack.c.b16 %v486, %v485
        %v501 = vpack.c.b16 %v488, %v487
        %v502 = vpack.c.b16 %v490, %v489
        %v503 = vpack.c.b16 %v492, %v491
        %v504 = vpack.c.b16 %v494, %v493
        %v505 = vpack.c.b16 %v496, %v495
        %v506 = vpack.c.b16 %v498, %v497
        %515 = vmatprep.subr.bf16.mxu0 0
        %516 = vmatpush1.bf16.msra.mxu0 %v499
        %517 = vmatprep.subr.bf16.mxu0 0
        %518 = vmatpush1.bf16.msra.mxu0 %v500
        %519 = vmatprep.subr.bf16.mxu0 0
        %520 = vmatpush1.bf16.msra.mxu0 %v501
        %521 = vmatprep.subr.bf16.mxu0 0
        %522 = vmatpush1.bf16.msra.mxu0 %v502
        %523 = vmatprep.subr.bf16.mxu0 0
        %524 = vmatpush1.bf16.msra.mxu0 %v503
        %525 = vmatprep.subr.bf16.mxu0 0
        %526 = vmatpush1.bf16.msra.mxu0 %v504
        %527 = vmatprep.subr.bf16.mxu0 0
        %528 = vmatpush1.bf16.msra.mxu0 %v505
        %529 = vmatprep.subr.bf16.mxu0 0
        %530 = vmatpush1.bf16.msra.mxu0 %v506
        %531 = vmatprep.subr.bf16.mxu0 0
        %532 = vmatpush1.bf16.msra.mxu0 0
        %533 = vmatprep.subr.bf16.mxu0 0
        %534 = vmatpush1.bf16.msra.mxu0 0
        %535 = vmatprep.subr.bf16.mxu0 0
        %536 = vmatpush1.bf16.msra.mxu0 0
        %537 = vmatprep.subr.bf16.mxu0 0
        %538 = vmatpush1.bf16.msra.mxu0 0
        %539 = vmatprep.subr.bf16.mxu0 0
        %540 = vmatpush1.bf16.msra.mxu0 0
        %541 = vmatprep.subr.bf16.mxu0 0
        %542 = vmatpush1.bf16.msra.mxu0 0
        %543 = vmatprep.subr.bf16.mxu0 0
        %544 = vmatpush1.bf16.msra.mxu0 0
        %545 = vmatprep.subr.bf16.mxu0 0
        %546 = vmatpush1.bf16.msra.mxu0 0
        %547 = vmatprep.mubr.bf16.mxu0 0
        %548 = vmatmul.mubr.bf16.gmra.mrb[0].mxu0 %v443
        %v549 = vpop.f32.mrb[0].mxu0
        %v550 = vadd.f32 %v465, %v549
        %v551 = vpop.f32.mrb[0].mxu0
        %v552 = vpop.f32.mrb[0].mxu0
        %v553 = vpop.f32.mrb[0].mxu0
        %554 = vdwg.mxu0
        %555 = vst [vmem:[%s300] sm:$0xff] %v550
        %s556 = sand.u32 %s165, 1
        %s557 = scalar_lea.sflag [#allocation5], %s556
        %s558 = sand.u32 %s165, 1
        %s559 = smul.addr %s558, 8
        %s560 = scalar_lea.vmem [#allocation9], %s559
        // Predicated region
        $region57: #{tpu_custom_call.1} parent=39 // pred_check
          %p561 = pneg %p175
        $region58: #{tpu_custom_call.1} parent=39 // pred_check_branch
          %563 = sbr.rel (%p561) target = $region60
        $region59: #{tpu_custom_call.1} parent=39 // pred_region
          %s565 = ssub.s32 128, 128
          %566 = vsyncadd %s557, %s565
          %s567 = sadd.s32 %s28, %s27
          %s568 = smul.addr %s567, 128
          %s569 = scalar_lea.hbm %s5, %s568
          %s571 = sshll.u32 %s560, 4
          %s572 = int_to_ptr.vmem [resolvable:$true] %s571
          %574 = dma.vmem_to_hbm [thread:$0]  %s572, 128, %s569, %s557
        $region60: #{tpu_custom_call.1} parent=39 // pred_fallthru
          _
      $region40: #{tpu_custom_call.1} parent=5 // pred_fallthru
        _
      %p575 = scmp.le.s32.totalorder 2, %s18
      // Predicated region
      $region61: #{tpu_custom_call.1} parent=5 // pred_check
        %p576 = pneg %p575
      $region62: #{tpu_custom_call.1} parent=5 // pred_check_branch
        %578 = sbr.rel (%p576) target = $region64
      $region63: #{tpu_custom_call.1} parent=5 // pred_region
        %s579 = ssub.s32 %s18, 2
        // Predicated region
        $region65: #{tpu_custom_call.1} parent=63 // pred_check
          %p580 = pneg %p181
        $region66: #{tpu_custom_call.1} parent=63 // pred_check_branch
          %582 = sbr.rel (%p580) target = $region68
        $region67: #{tpu_custom_call.1} parent=63 // pred_region
          %s583 = sand.u32 %s166, 1
          %s584 = scalar_lea.sflag [#allocation5], %s583
          %s585 = sand.u32 %s166, 1
          %s586 = smul.addr %s585, 8
          %s587 = scalar_lea.vmem [#allocation9], %s586
          %588 = dma.done %s584, 128
        $region68: #{tpu_custom_call.1} parent=63 // pred_fallthru
          _
      $region64: #{tpu_custom_call.1} parent=5 // pred_fallthru
        _
    $region6: #{tpu_custom_call.1} parent=1 // loop_footer
      %s22 = sadd.s32 1, %s18
    $region7: #{tpu_custom_call.1} parent=1 // loop_footer_branch
      %17 = sbr.rel target = $region3
    $region8: #{tpu_custom_call.1} parent=1 // loop_exit
      _
    %589 = vsyncpa [#allocation4], 1
    %s590 = scalar_lea.sflag [#allocation4], 1
    %591 = vsyncpa %s590, 1
    %592 = vsyncpa [#allocation7], 1
    %593 = vsyncpa [#allocation5], 1
    %s594 = scalar_lea.sflag [#allocation5], 1
    %595 = vsyncpa %s594, 1

</llo_original>
